<compile_context>
chip_gen: v6e
topology: v6e:2x2x1
jax: 0.10.0
libtpu: 0.0.40
codegen_flags: <defaults>
</compile_context>

<pallas_src>
import functools
import math

import jax
import jax.numpy as jnp
from jax import lax
from jax.experimental import pallas as pl
from jax.experimental.pallas import tpu as pltpu


def _round_up(x, m):
    return (x + m - 1) // m * m


def _vmem_capacity_bytes():
    """Per-core VMEM capacity (falls back to a v7x-safe 64 MiB)."""
    try:
        info = pltpu.get_tpu_info()
        cap = getattr(info, "vmem_capacity_bytes", None)
        if cap:
            return max(16 * 1024 * 1024, min(int(cap), 128 * 1024 * 1024))
    except Exception:
        pass
    return 64 * 1024 * 1024


def _tn_options(ocp):
    opts = []
    for t in (min(ocp, 512), 256, 128):
        if t <= ocp and ocp % t == 0 and t not in opts:
            opts.append(t)
    return opts


# ---------------------------------------------------------------------------
# Fused stride-1 path: KW taps applied in-kernel over full padded rows.
# ---------------------------------------------------------------------------
def _conv_rows_kernel(y_ref, w_ref, b_ref, o_ref, *, kw_taps, ow):
    # y_ref: (TR, WP, QK) row-patch block (QK = C*KH), compute dtype
    # w_ref: (KW, QK, TN) weight taps, compute dtype
    # b_ref: (1, TN) f32 bias row
    # o_ref: (TR*OW, TN) output tile
    qk = y_ref.shape[-1]
    acc = jnp.zeros(o_ref.shape, jnp.float32)
    for kw in range(kw_taps):                       # static, small (e.g. 3)
        lhs = y_ref[:, kw:kw + ow, :].reshape(-1, qk)    # (TR*OW, QK)
        acc = acc + jnp.dot(lhs, w_ref[kw], preferred_element_type=jnp.float32)
    out = acc + b_ref[...]                          # bias in f32
    o_ref[...] = jnp.maximum(out, 0.0).astype(o_ref.dtype)  # ReLU in f32


def _fused_tile_plan(n_rows, ow, wp, qk, ocp, kw_taps, in_item, out_item, budget):
    sub_in = 8 * max(1, 4 // in_item)               # 8 (f32) / 16 (bf16)
    sub_out = 8 * max(1, 4 // out_item)
    g = sub_out // math.gcd(ow, sub_out)            # TR granularity so TR*OW % 8 == 0

    tn_opts = _tn_options(ocp)

    def est(tr, tn):
        y_blk = 2 * tr * _round_up(wp, sub_in) * _round_up(qk, 128) * in_item
        w_blk = 2 * kw_taps * _round_up(qk, sub_in) * tn * in_item
        o_blk = 2 * tr * ow * tn * out_item
        acc = tr * ow * tn * 4
        lhs = tr * ow * _round_up(qk, 128) * in_item
        return y_blk + w_blk + o_blk + acc + lhs + 2 * 8 * tn * 4

    tr_target = max(g, (max(1, 1024 // max(ow, 1)) // g) * g)
    tr = max(g, min(tr_target, _round_up(n_rows, g)))
    ti, tn = 0, tn_opts[0]
    while est(tr, tn) > budget:
        if tr > g:
            tr = max(g, ((tr // 2) // g) * g)
        elif ti + 1 < len(tn_opts):
            ti += 1
            tn = tn_opts[ti]
        else:
            return None                              # give up -> im2col fallback
    return tr, tn, est(tr, tn)


def _fused_rows_forward(x, weight, bias, padding, compute_dtype):
    """stride == 1 conv + bias + ReLU. Returns NHWC, or None if tiles don't fit."""
    n, c, h, w = x.shape
    oc, _, kh, kw_taps = weight.shape
    oh = h + 2 * padding - kh + 1
    ow = w + 2 * padding - kw_taps + 1
    wp = w + 2 * padding
    qk = c * kh
    n_rows = n * oh
    m = n_rows * ow
    ocp = _round_up(oc, 128)                        # lane-dense output / MXU N dim

    in_item = jnp.dtype(compute_dtype).itemsize
    out_item = jnp.dtype(x.dtype).itemsize
    vmem_cap = _vmem_capacity_bytes()
    plan = _fused_tile_plan(n_rows, ow, wp, qk, ocp, kw_taps, in_item, out_item,
                            int(vmem_cap * 0.7))
    if plan is None:
        return None
    tr, tn, est = plan

    # Cast BEFORE patch extraction so the patch tensor is materialized at the
    # compute width.  Column patches: only a KHx blow-up (vs KH*KW for im2col);
    # feature order is (c, kh) c-major, matching the weight reshape below.
    xc = x.astype(compute_dtype)
    ypatch = lax.conv_general_dilated_patches(
        xc, (kh, 1), (1, 1),
        [(padding, padding), (padding, padding)],
        dimension_numbers=("NCHW", "OIHW", "NHWC"),
    )                                               # (N, OH, WP, C*KH)
    y2 = ypatch.reshape(n_rows, wp, qk)

    w2 = weight.transpose(3, 1, 2, 0).reshape(kw_taps, qk, oc).astype(compute_dtype)
    if ocp != oc:
        w2 = jnp.pad(w2, ((0, 0), (0, 0), (0, ocp - oc)))
    b_row = jnp.pad(bias.astype(jnp.float32), (0, ocp - oc)).reshape(1, ocp)

    grid = (pl.cdiv(n_rows, tr), ocp // tn)
    vmem_limit = min(max(int(est * 1.5), 32 * 1024 * 1024), int(vmem_cap * 0.9))

    kernel = functools.partial(_conv_rows_kernel, kw_taps=kw_taps, ow=ow)
    out_flat = pl.pallas_call(
        kernel,
        out_shape=jax.ShapeDtypeStruct((m, ocp), x.dtype),
        grid_spec=pltpu.PrefetchScalarGridSpec(
            num_scalar_prefetch=0,
            grid=grid,
            in_specs=[
                pl.BlockSpec((tr, wp, qk), lambda i, j: (i, 0, 0)),
                pl.BlockSpec((kw_taps, qk, tn), lambda i, j: (0, 0, j)),
                pl.BlockSpec((1, tn), lambda i, j: (0, j)),
            ],
            out_specs=pl.BlockSpec((tr * ow, tn), lambda i, j: (i, j)),
        ),
        compiler_params=pltpu.CompilerParams(
            dimension_semantics=("parallel", "parallel"),
            vmem_limit_bytes=vmem_limit,
        ),
    )(y2, w2, b_row)

    out = out_flat[:, :oc] if ocp != oc else out_flat
    return out.reshape(n, oh, ow, oc)


# ---------------------------------------------------------------------------
# Fallback path (stride != 1 or fused tiles don't fit): full-im2col matmul.
# ---------------------------------------------------------------------------
def _im2col_matmul_kernel(a_ref, w_ref, b_ref, o_ref, acc_ref):
    k = pl.program_id(2)

    @pl.when(k == 0)
    def _init():
        acc_ref[...] = jnp.zeros_like(acc_ref)

    acc_ref[...] += jnp.dot(a_ref[...], w_ref[...],
                            preferred_element_type=jnp.float32)

    @pl.when(k == pl.num_programs(2) - 1)
    def _finalize():
        out = acc_ref[...] + b_ref[...]
        o_ref[...] = jnp.maximum(out, 0.0).astype(o_ref.dtype)


def _im2col_forward(x, weight, bias, stride, padding, compute_dtype):
    n, c, h, w = x.shape
    oc, _, kh, kw_taps = weight.shape
    oh = (h + 2 * padding - kh) // stride + 1
    ow = (w + 2 * padding - kw_taps) // stride + 1

    xc = x.astype(compute_dtype)                    # cast before blow-up
    patches = lax.conv_general_dilated_patches(
        xc, (kh, kw_taps), (stride, stride),
        [(padding, padding), (padding, padding)],
        dimension_numbers=("NCHW", "OIHW", "NHWC"),
    )                                               # (N, OH, OW, C*KH*KW)
    k_dim = c * kh * kw_taps
    m = n * oh * ow
    cols = patches.reshape(m, k_dim)

    itemsize = jnp.dtype(compute_dtype).itemsize
    sub = 8 * max(1, 4 // itemsize)
    vmem_cap = _vmem_capacity_bytes()
    budget = int(vmem_cap * 0.7)

    ocp = _round_up(oc, 128)
    tn_opts = _tn_options(ocp)
    ti, tn = 0, tn_opts[0]

    if k_dim <= 2048:
        tk, kp = k_dim, k_dim
    else:
        tk = 512
        kp = _round_up(k_dim, tk)

    tm = min(_round_up(1024, sub), _round_up(m, sub))

    def est(tm_, tn_, tk_):
        return (2 * tm_ * _round_up(tk_, 128) * itemsize     # A
                + 2 * _round_up(tk_, sub) * tn_ * itemsize   # W
                + 2 * tm_ * tn_ * 4                          # out
                + tm_ * tn_ * 4                              # f32 acc
                + 2 * 8 * tn_ * 4)                           # bias

    while est(tm, tn, tk) > budget and (tm > sub or ti + 1 < len(tn_opts)):
        if tm > sub:
            tm = max(sub, ((tm // 2) // sub) * sub)
        else:
            ti += 1
            tn = tn_opts[ti]

    m_pad = _round_up(m, tm)
    if m_pad != m or kp != k_dim:
        cols = jnp.pad(cols, ((0, m_pad - m), (0, kp - k_dim)))

    w_mat = weight.reshape(oc, k_dim).T.astype(compute_dtype)
    if kp != k_dim or ocp != oc:
        w_mat = jnp.pad(w_mat, ((0, kp - k_dim), (0, ocp - oc)))
    b_row = jnp.pad(bias.astype(jnp.float32), (0, ocp - oc)).reshape(1, ocp)

    grid = (m_pad // tm, ocp // tn, kp // tk)
    vmem_limit = min(max(int(est(tm, tn, tk) * 1.5), 32 * 1024 * 1024),
                     int(vmem_cap * 0.9))

    out_flat = pl.pallas_call(
        _im2col_matmul_kernel,
        out_shape=jax.ShapeDtypeStruct((m_pad, ocp), x.dtype),
        grid_spec=pltpu.PrefetchScalarGridSpec(
            num_scalar_prefetch=0,
            grid=grid,
            in_specs=[
                pl.BlockSpec((tm, tk), lambda i, j, k: (i, k)),
                pl.BlockSpec((tk, tn), lambda i, j, k: (k, j)),
                pl.BlockSpec((1, tn), lambda i, j, k: (0, j)),
            ],
            out_specs=pl.BlockSpec((tm, tn), lambda i, j, k: (i, j)),
            scratch_shapes=[pltpu.VMEM((tm, tn), jnp.float32)],
        ),
        compiler_params=pltpu.CompilerParams(
            dimension_semantics=("parallel", "parallel", "arbitrary"),
            vmem_limit_bytes=vmem_limit,
        ),
    )(cols, w_mat, b_row)

    return out_flat[:m, :oc].reshape(n, oh, ow, oc)


# ---------------------------------------------------------------------------
# Public forward (matches Conv2dBlock: zero-pad -> conv2d(+bias) -> ReLU).
# ---------------------------------------------------------------------------
@functools.partial(
    jax.jit,
    static_argnames=("stride", "padding", "compute_dtype", "nhwc_output"))
def conv2d_block_forward(x, weight, bias, *, stride, padding,
                         compute_dtype=jnp.bfloat16, nhwc_output=False):
    """x: (N,C,H,W) f32; weight: (OC,C,KH,KW); bias: (OC,) -> (N,OC,OH,OW)."""
    out_nhwc = None
    if stride == 1:
        out_nhwc = _fused_rows_forward(x, weight, bias, padding, compute_dtype)
    if out_nhwc is None:
        out_nhwc = _im2col_forward(x, weight, bias, stride, padding, compute_dtype)
    if nhwc_output:
        return out_nhwc
    return out_nhwc.transpose(0, 3, 1, 2)


def _reference(x, weight, bias, stride, padding):
    out = lax.conv_general_dilated(
        x, weight,
        window_strides=(stride, stride),
        padding=[(padding, padding), (padding, padding)],
        dimension_numbers=("NCHW", "OIHW", "NCHW"),
    )
    out = out + bias.reshape(1, -1, 1, 1)
    return jnp.maximum(out, 0.0)


if __name__ == "__main__":
    # Conv2dBlock(input_dim=4, output_dim=8, kernel_size=3, stride=1, padding=1,
    #             norm='none', activation='relu', pad_type='zero')
    N, C, H, W = 2, 4, 16, 16
    OC, KH, KW = 8, 3, 3
    STRIDE, PADDING = 1, 1

    key = jax.random.PRNGKey(0)
    kx, kw_, kb = jax.random.split(key, 3)
    x = jax.random.normal(kx, (N, C, H, W), dtype=jnp.float32)
    fan_in = C * KH * KW
    bound = 1.0 / (fan_in ** 0.5)
    weight = jax.random.uniform(kw_, (OC, C, KH, KW), jnp.float32, -bound, bound)
    bias = jax.random.uniform(kb, (OC,), jnp.float32, -bound, bound)

    ref = _reference(x, weight, bias, STRIDE, PADDING)

    # Default path: fused stride-1 kernel, bf16 matmul operands, f32 accumulate.
    out = conv2d_block_forward(x, weight, bias, stride=STRIDE, padding=PADDING)
    out = jax.block_until_ready(out)
    assert out.shape == (N, OC, H, W), out.shape
    assert jnp.allclose(out, ref, atol=5e-2, rtol=5e-2), float(
        jnp.max(jnp.abs(out - ref)))

    # Exact-parity check of the fused path in f32.
    out32 = conv2d_block_forward(x, weight, bias, stride=STRIDE, padding=PADDING,
                                 compute_dtype=jnp.float32)
    out32 = jax.block_until_ready(out32)
    assert jnp.allclose(out32, ref, atol=1e-5, rtol=1e-5), float(
        jnp.max(jnp.abs(out32 - ref)))

    # stride=2 exercises the im2col fallback path.
    ref2 = _reference(x, weight, bias, 2, PADDING)
    out2 = conv2d_block_forward(x, weight, bias, stride=2, padding=PADDING,
                                compute_dtype=jnp.float32)
    out2 = jax.block_until_ready(out2)
    assert out2.shape == ref2.shape, (out2.shape, ref2.shape)
    assert jnp.allclose(out2, ref2, atol=1e-5, rtol=1e-5), float(
        jnp.max(jnp.abs(out2 - ref2)))

    print("KERNEL_OK")
</pallas_src>

<mosaic_0001>
module attributes {stable_mosaic.version = 11 : i64} {
  func.func @_conv_rows_kernel(%arg0: i32, %arg1: i32, %arg2: memref<32x18x12xbf16, #tpu.memory_space<vmem>>, %arg3: memref<3x12x128xbf16, #tpu.memory_space<vmem>>, %arg4: memref<1x128xf32, #tpu.memory_space<vmem>>, %arg5: memref<512x128xf32, #tpu.memory_space<vmem>>) attributes {dimension_semantics = [#tpu.dimension_semantics<parallel>, #tpu.dimension_semantics<parallel>], iteration_bounds = array<i64: 1, 1>, scalar_prefetch = 0 : i64, scratch_operands = 0 : i64, tpu.core_type = #tpu.core_type<tc>, window_params = [{transform_indices = @transform_0, window_bounds = array<i64: 32, 18, 12>}, {transform_indices = @transform_1, window_bounds = array<i64: 3, 12, 128>}, {transform_indices = @transform_2, window_bounds = array<i64: 1, 128>}, {transform_indices = @transform_3, window_bounds = array<i64: 512, 128>}]} {
    %cst = arith.constant 0.000000e+00 : f32
    %0 = vector.broadcast %cst : f32 to vector<512x128xf32>
    %c0 = arith.constant 0 : index
    %c0_0 = arith.constant 0 : index
    %c0_1 = arith.constant 0 : index
    %1 = vector.load %arg2[%c0, %c0_0, %c0_1] : memref<32x18x12xbf16, #tpu.memory_space<vmem>>, vector<32x16x12xbf16>
    %2 = vector.shape_cast %1 : vector<32x16x12xbf16> to vector<512x12xbf16>
    %c0_2 = arith.constant 0 : index
    %c0_3 = arith.constant 0 : index
    %c0_4 = arith.constant 0 : index
    %3 = vector.load %arg3[%c0_2, %c0_3, %c0_4] : memref<3x12x128xbf16, #tpu.memory_space<vmem>>, vector<1x12x128xbf16>
    %4 = vector.shape_cast %3 : vector<1x12x128xbf16> to vector<12x128xbf16>
    %cst_5 = arith.constant dense<0.000000e+00> : vector<512x128xf32>
    %5 = tpu.matmul %2, %4, %cst_5 {dimension_numbers = #tpu.dot_dimension_numbers<[1], [0], [0], [1], [0, 0, 1, 1], [], []>} : vector<512x12xbf16>, vector<12x128xbf16>, vector<512x128xf32> -> vector<512x128xf32>
    %6 = arith.addf %0, %5 : vector<512x128xf32>
    %c0_6 = arith.constant 0 : index
    %c1 = arith.constant 1 : index
    %c0_7 = arith.constant 0 : index
    %7 = vector.load %arg2[%c0_6, %c1, %c0_7] : memref<32x18x12xbf16, #tpu.memory_space<vmem>>, vector<32x16x12xbf16>
    %8 = vector.shape_cast %7 : vector<32x16x12xbf16> to vector<512x12xbf16>
    %c1_8 = arith.constant 1 : index
    %c0_9 = arith.constant 0 : index
    %c0_10 = arith.constant 0 : index
    %9 = vector.load %arg3[%c1_8, %c0_9, %c0_10] : memref<3x12x128xbf16, #tpu.memory_space<vmem>>, vector<1x12x128xbf16>
    %10 = vector.shape_cast %9 : vector<1x12x128xbf16> to vector<12x128xbf16>
    %cst_11 = arith.constant dense<0.000000e+00> : vector<512x128xf32>
    %11 = tpu.matmul %8, %10, %cst_11 {dimension_numbers = #tpu.dot_dimension_numbers<[1], [0], [0], [1], [0, 0, 1, 1], [], []>} : vector<512x12xbf16>, vector<12x128xbf16>, vector<512x128xf32> -> vector<512x128xf32>
    %12 = arith.addf %6, %11 : vector<512x128xf32>
    %c0_12 = arith.constant 0 : index
    %c2 = arith.constant 2 : index
    %c0_13 = arith.constant 0 : index
    %13 = vector.load %arg2[%c0_12, %c2, %c0_13] : memref<32x18x12xbf16, #tpu.memory_space<vmem>>, vector<32x16x12xbf16>
    %14 = vector.shape_cast %13 : vector<32x16x12xbf16> to vector<512x12xbf16>
    %c2_14 = arith.constant 2 : index
    %c0_15 = arith.constant 0 : index
    %c0_16 = arith.constant 0 : index
    %15 = vector.load %arg3[%c2_14, %c0_15, %c0_16] : memref<3x12x128xbf16, #tpu.memory_space<vmem>>, vector<1x12x128xbf16>
    %16 = vector.shape_cast %15 : vector<1x12x128xbf16> to vector<12x128xbf16>
    %cst_17 = arith.constant dense<0.000000e+00> : vector<512x128xf32>
    %17 = tpu.matmul %14, %16, %cst_17 {dimension_numbers = #tpu.dot_dimension_numbers<[1], [0], [0], [1], [0, 0, 1, 1], [], []>} : vector<512x12xbf16>, vector<12x128xbf16>, vector<512x128xf32> -> vector<512x128xf32>
    %18 = arith.addf %12, %17 : vector<512x128xf32>
    %c0_18 = arith.constant 0 : index
    %c0_19 = arith.constant 0 : index
    %19 = vector.load %arg4[%c0_18, %c0_19] : memref<1x128xf32, #tpu.memory_space<vmem>>, vector<1x128xf32>
    %20 = vector.broadcast %19 : vector<1x128xf32> to vector<512x128xf32>
    %21 = arith.addf %18, %20 : vector<512x128xf32>
    %cst_20 = arith.constant 0.000000e+00 : f32
    %22 = vector.broadcast %cst_20 : f32 to vector<512x128xf32>
    %23 = arith.maximumf %21, %22 : vector<512x128xf32>
    %c0_21 = arith.constant 0 : index
    %c0_22 = arith.constant 0 : index
    %24 = vector.load %arg5[%c0_21, %c0_22] : memref<512x128xf32, #tpu.memory_space<vmem>>, vector<512x128xf32>
    tpu.vector_store %arg5[%c0_21, %c0_22], %23 {strides = array<i32>} : memref<512x128xf32, #tpu.memory_space<vmem>>, vector<512x128xf32>,
    return
  }
  func.func @transform_0(%arg0: i32, %arg1: i32) -> (i32, i32, i32) {
    %c0_i32 = arith.constant 0 : i32
    %c0_i32_0 = arith.constant 0 : i32
    %c0_i32_1 = arith.constant 0 : i32
    return %arg0, %c0_i32, %c0_i32_0 : i32, i32, i32
  }
  func.func @transform_1(%arg0: i32, %arg1: i32) -> (i32, i32, i32) {
    %c0_i32 = arith.constant 0 : i32
    %c0_i32_0 = arith.constant 0 : i32
    %c0_i32_1 = arith.constant 0 : i32
    return %c0_i32, %c0_i32_0, %arg1 : i32, i32, i32
  }
  func.func @transform_2(%arg0: i32, %arg1: i32) -> (i32, i32) {
    %c0_i32 = arith.constant 0 : i32
    %c0_i32_0 = arith.constant 0 : i32
    return %c0_i32, %arg1 : i32, i32
  }
  func.func @transform_3(%arg0: i32, %arg1: i32) -> (i32, i32) {
    %c0_i32 = arith.constant 0 : i32
    return %arg0, %arg1 : i32, i32
  }
}

</mosaic_0001>

<llo_original>
// kernel: conv2d_block_forward.1
$region0: #{conv2d_block_forward.1}
  #allocation0 [shape = 'u32[]', space=smem, size = 0x4, offset = 0x4, fixed_abs, tag = 'smem constant byte address 0x4 - core index']
  #allocation1 [shape = 'u32[144,128]{1,0:T(1,128)}', space=vmem, size = 0x12000, scoped, tag = 'internal scratch']
  %s0 = inlined_call_operand.vmem [shape: bf16[32,18,12], index: 0, kind: input, shape index: {}]
  %s1 = inlined_call_operand.vmem [shape: bf16[3,12,128], index: 1, kind: input, shape index: {}]
  %s2 = inlined_call_operand.vmem [shape: f32[1,128], index: 2, kind: input, shape index: {}]
  %s3 = inlined_call_operand.vmem [shape: f32[512,128], index: 3, kind: output, shape index: {}]
  %s4 = sld [smem:[#allocation0]]
  $region22: #{conv2d_block_forward.1} parent=0
    _
  %s6 = ssub.s32 1, %s4
  %s7 = scalar_select 0, %s6, %s4
  // Predicated region
  $region2: #{conv2d_block_forward.1} parent=0 // pred_check
    _
  $region3: #{conv2d_block_forward.1} parent=0 // pred_check_branch
    %9 = sbr.rel (0) target = $region5
  $region4: #{conv2d_block_forward.1} parent=0 // pred_region
    _
  $region5: #{conv2d_block_forward.1} parent=0 // pred_fallthru
    _
  // Predicated region
  $region6: #{conv2d_block_forward.1} parent=0 // pred_check
    _
  $region7: #{conv2d_block_forward.1} parent=0 // pred_check_branch
    %11 = sbr.rel (0) target = $region9
  $region8: #{conv2d_block_forward.1} parent=0 // pred_region
    _
  $region9: #{conv2d_block_forward.1} parent=0 // pred_fallthru
    _
  // Predicated region
  $region10: #{conv2d_block_forward.1} parent=0 // pred_check
    _
  $region11: #{conv2d_block_forward.1} parent=0 // pred_check_branch
    %13 = sbr.rel (0) target = $region13
  $region12: #{conv2d_block_forward.1} parent=0 // pred_region
    _
  $region13: #{conv2d_block_forward.1} parent=0 // pred_fallthru
    _
  %v15 = vld [vmem:[%s0] sm:$0xf]
  %v16 = vld [vmem:[%s0 + $0x4] sm:$0xf]
  %v17 = vld [vmem:[%s0 + $0xc] sm:$0xf]
  %v18 = vld [vmem:[%s0 + $0x10] sm:$0xf]
  %v19 = vld [vmem:[%s0 + $0x18] sm:$0xf]
  %v20 = vld [vmem:[%s0 + $0x1c] sm:$0xf]
  %v21 = vld [vmem:[%s0 + $0x24] sm:$0xf]
  %v22 = vld [vmem:[%s0 + $0x28] sm:$0xf]
  %v23 = vld [vmem:[%s0 + $0x30] sm:$0xf]
  %v24 = vld [vmem:[%s0 + $0x34] sm:$0xf]
  %v25 = vld [vmem:[%s0 + $0x3c] sm:$0xf]
  %v26 = vld [vmem:[%s0 + $0x40] sm:$0xf]
  %v27 = vld [vmem:[%s0 + $0x48] sm:$0xf]
  %v28 = vld [vmem:[%s0 + $0x4c] sm:$0xf]
  %v29 = vld [vmem:[%s0 + $0x54] sm:$0xf]
  %v30 = vld [vmem:[%s0 + $0x58] sm:$0xf]
  %v31 = vld [vmem:[%s0 + $0x60] sm:$0xf]
  %v32 = vld [vmem:[%s0 + $0x64] sm:$0xf]
  %v33 = vld [vmem:[%s0 + $0x6c] sm:$0xf]
  %v34 = vld [vmem:[%s0 + $0x70] sm:$0xf]
  %v35 = vld [vmem:[%s0 + $0x78] sm:$0xf]
  %v36 = vld [vmem:[%s0 + $0x7c] sm:$0xf]
  %v37 = vld [vmem:[%s0 + $0x84] sm:$0xf]
  %v38 = vld [vmem:[%s0 + $0x88] sm:$0xf]
  %v39 = vld [vmem:[%s0 + $0x90] sm:$0xf]
  %v40 = vld [vmem:[%s0 + $0x94] sm:$0xf]
  %v41 = vld [vmem:[%s0 + $0x9c] sm:$0xf]
  %v42 = vld [vmem:[%s0 + $0xa0] sm:$0xf]
  %v43 = vld [vmem:[%s0 + $0xa8] sm:$0xf]
  %v44 = vld [vmem:[%s0 + $0xac] sm:$0xf]
  %v45 = vld [vmem:[%s0 + $0xb4] sm:$0xf]
  %v46 = vld [vmem:[%s0 + $0xb8] sm:$0xf]
  %v47 = vld [vmem:[%s0 + $0xc0] sm:$0xf]
  %v48 = vld [vmem:[%s0 + $0xc4] sm:$0xf]
  %v49 = vld [vmem:[%s0 + $0xcc] sm:$0xf]
  %v50 = vld [vmem:[%s0 + $0xd0] sm:$0xf]
  %v51 = vld [vmem:[%s0 + $0xd8] sm:$0xf]
  %v52 = vld [vmem:[%s0 + $0xdc] sm:$0xf]
  %v53 = vld [vmem:[%s0 + $0xe4] sm:$0xf]
  %v54 = vld [vmem:[%s0 + $0xe8] sm:$0xf]
  %v55 = vld [vmem:[%s0 + $0xf0] sm:$0xf]
  %v56 = vld [vmem:[%s0 + $0xf4] sm:$0xf]
  %v57 = vld [vmem:[%s0 + $0xfc] sm:$0xf]
  %v58 = vld [vmem:[%s0 + $0x100] sm:$0xf]
  %v59 = vld [vmem:[%s0 + $0x108] sm:$0xf]
  %v60 = vld [vmem:[%s0 + $0x10c] sm:$0xf]
  %v61 = vld [vmem:[%s0 + $0x114] sm:$0xf]
  %v62 = vld [vmem:[%s0 + $0x118] sm:$0xf]
  %v63 = vld [vmem:[%s0 + $0x120] sm:$0xf]
  %v64 = vld [vmem:[%s0 + $0x124] sm:$0xf]
  %v65 = vld [vmem:[%s0 + $0x12c] sm:$0xf]
  %v66 = vld [vmem:[%s0 + $0x130] sm:$0xf]
  %v67 = vld [vmem:[%s0 + $0x138] sm:$0xf]
  %v68 = vld [vmem:[%s0 + $0x13c] sm:$0xf]
  %v69 = vld [vmem:[%s0 + $0x144] sm:$0xf]
  %v70 = vld [vmem:[%s0 + $0x148] sm:$0xf]
  %v71 = vld [vmem:[%s0 + $0x150] sm:$0xf]
  %v72 = vld [vmem:[%s0 + $0x154] sm:$0xf]
  %v73 = vld [vmem:[%s0 + $0x15c] sm:$0xf]
  %v74 = vld [vmem:[%s0 + $0x160] sm:$0xf]
  %v75 = vld [vmem:[%s0 + $0x168] sm:$0xf]
  %v76 = vld [vmem:[%s0 + $0x16c] sm:$0xf]
  %v77 = vld [vmem:[%s0 + $0x174] sm:$0xf]
  %v78 = vld [vmem:[%s0 + $0x178] sm:$0xf]
  %v79 = vld [vmem:[%s1] sm:$0xf]
  %v80 = vld [vmem:[%s1 + $0x4] sm:$0x3]
  %v81 = vld [vmem:[%s0 + $0x8] sm:$0x1]
  %v82 = vld [vmem:[%s0 + $0x14] sm:$0x1]
  %v83 = vld [vmem:[%s0 + $0x20] sm:$0x1]
  %v84 = vld [vmem:[%s0 + $0x2c] sm:$0x1]
  %v85 = vld [vmem:[%s0 + $0x38] sm:$0x1]
  %v86 = vld [vmem:[%s0 + $0x44] sm:$0x1]
  %v87 = vld [vmem:[%s0 + $0x50] sm:$0x1]
  %v88 = vld [vmem:[%s0 + $0x5c] sm:$0x1]
  %v89 = vld [vmem:[%s0 + $0x68] sm:$0x1]
  %v90 = vld [vmem:[%s0 + $0x74] sm:$0x1]
  %v91 = vld [vmem:[%s0 + $0x80] sm:$0x1]
  %v92 = vld [vmem:[%s0 + $0x8c] sm:$0x1]
  %v93 = vld [vmem:[%s0 + $0x98] sm:$0x1]
  %v94 = vld [vmem:[%s0 + $0xa4] sm:$0x1]
  %v95 = vld [vmem:[%s0 + $0xb0] sm:$0x1]
  %v96 = vld [vmem:[%s0 + $0xbc] sm:$0x1]
  %v97 = vld [vmem:[%s0 + $0xc8] sm:$0x1]
  %v98 = vld [vmem:[%s0 + $0xd4] sm:$0x1]
  %v99 = vld [vmem:[%s0 + $0xe0] sm:$0x1]
  %v100 = vld [vmem:[%s0 + $0xec] sm:$0x1]
  %v101 = vld [vmem:[%s0 + $0xf8] sm:$0x1]
  %v102 = vld [vmem:[%s0 + $0x104] sm:$0x1]
  %v103 = vld [vmem:[%s0 + $0x110] sm:$0x1]
  %v104 = vld [vmem:[%s0 + $0x11c] sm:$0x1]
  %v105 = vld [vmem:[%s0 + $0x128] sm:$0x1]
  %v106 = vld [vmem:[%s0 + $0x134] sm:$0x1]
  %v107 = vld [vmem:[%s0 + $0x140] sm:$0x1]
  %v108 = vld [vmem:[%s0 + $0x14c] sm:$0x1]
  %v109 = vld [vmem:[%s0 + $0x158] sm:$0x1]
  %v110 = vld [vmem:[%s0 + $0x164] sm:$0x1]
  %v111 = vld [vmem:[%s0 + $0x170] sm:$0x1]
  %v112 = vld [vmem:[%s0 + $0x17c] sm:$0x1]
  %vm113 = vsmask.f32 3328
  %vm114 = vsmask.f32 7440
  %vm115 = vmor %vm113, %vm114
  %v117 = vshrl.u32 %v15, 16
  %v119 = vrot.slane %v117, 4
  %v120 = vshll.u32 %v15, 16
  %v122 = vrot.slane %v120, 5
  %v123 = vor.u32 %v119, %v122
  %v124 = vrot.slane %v123, 4
  %v126 = vshll.u32 %v16, 16
  %v128 = vrot.slane %v126, 5
  %v129 = vsel %vm115, %v124, %v128
  %v130 = vshrl.u32 %v16, 16
  %v132 = vrot.slane %v130, 4
  %v133 = vor.u32 %v132, %v128
  %v134 = vrot.slane %v133, 4
  %v136 = vshll.u32 %v81, 16
  %v138 = vrot.slane %v136, 5
  %v139 = vsel %vm115, %v134, %v138
  %v141 = vshrl.u32 %v17, 16
  %v143 = vrot.slane %v141, 4
  %v144 = vshll.u32 %v17, 16
  %v146 = vrot.slane %v144, 5
  %v147 = vor.u32 %v143, %v146
  %v148 = vrot.slane %v147, 4
  %v150 = vshll.u32 %v18, 16
  %v152 = vrot.slane %v150, 5
  %v153 = vsel %vm115, %v148, %v152
  %v154 = vshrl.u32 %v18, 16
  %v156 = vrot.slane %v154, 4
  %v157 = vor.u32 %v156, %v152
  %v158 = vrot.slane %v157, 4
  %v160 = vshll.u32 %v82, 16
  %v162 = vrot.slane %v160, 5
  %v163 = vsel %vm115, %v158, %v162
  %v165 = vshrl.u32 %v19, 16
  %v167 = vrot.slane %v165, 4
  %v168 = vshll.u32 %v19, 16
  %v170 = vrot.slane %v168, 5
  %v171 = vor.u32 %v167, %v170
  %v172 = vrot.slane %v171, 4
  %v174 = vshll.u32 %v20, 16
  %v176 = vrot.slane %v174, 5
  %v177 = vsel %vm115, %v172, %v176
  %v178 = vshrl.u32 %v20, 16
  %v180 = vrot.slane %v178, 4
  %v181 = vor.u32 %v180, %v176
  %v182 = vrot.slane %v181, 4
  %v184 = vshll.u32 %v83, 16
  %v186 = vrot.slane %v184, 5
  %v187 = vsel %vm115, %v182, %v186
  %v189 = vshrl.u32 %v21, 16
  %v191 = vrot.slane %v189, 4
  %v192 = vshll.u32 %v21, 16
  %v194 = vrot.slane %v192, 5
  %v195 = vor.u32 %v191, %v194
  %v196 = vrot.slane %v195, 4
  %v198 = vshll.u32 %v22, 16
  %v200 = vrot.slane %v198, 5
  %v201 = vsel %vm115, %v196, %v200
  %v202 = vshrl.u32 %v22, 16
  %v204 = vrot.slane %v202, 4
  %v205 = vor.u32 %v204, %v200
  %v206 = vrot.slane %v205, 4
  %v208 = vshll.u32 %v84, 16
  %v210 = vrot.slane %v208, 5
  %v211 = vsel %vm115, %v206, %v210
  %v213 = vshrl.u32 %v23, 16
  %v215 = vrot.slane %v213, 4
  %v216 = vshll.u32 %v23, 16
  %v218 = vrot.slane %v216, 5
  %v219 = vor.u32 %v215, %v218
  %v220 = vrot.slane %v219, 4
  %v222 = vshll.u32 %v24, 16
  %v224 = vrot.slane %v222, 5
  %v225 = vsel %vm115, %v220, %v224
  %v226 = vshrl.u32 %v24, 16
  %v228 = vrot.slane %v226, 4
  %v229 = vor.u32 %v228, %v224
  %v230 = vrot.slane %v229, 4
  %v232 = vshll.u32 %v85, 16
  %v234 = vrot.slane %v232, 5
  %v235 = vsel %vm115, %v230, %v234
  %v237 = vshrl.u32 %v25, 16
  %v239 = vrot.slane %v237, 4
  %v240 = vshll.u32 %v25, 16
  %v242 = vrot.slane %v240, 5
  %v243 = vor.u32 %v239, %v242
  %v244 = vrot.slane %v243, 4
  %v246 = vshll.u32 %v26, 16
  %v248 = vrot.slane %v246, 5
  %v249 = vsel %vm115, %v244, %v248
  %v250 = vshrl.u32 %v26, 16
  %v252 = vrot.slane %v250, 4
  %v253 = vor.u32 %v252, %v248
  %v254 = vrot.slane %v253, 4
  %v256 = vshll.u32 %v86, 16
  %v258 = vrot.slane %v256, 5
  %v259 = vsel %vm115, %v254, %v258
  %v261 = vshrl.u32 %v27, 16
  %v263 = vrot.slane %v261, 4
  %v264 = vshll.u32 %v27, 16
  %v266 = vrot.slane %v264, 5
  %v267 = vor.u32 %v263, %v266
  %v268 = vrot.slane %v267, 4
  %v270 = vshll.u32 %v28, 16
  %v272 = vrot.slane %v270, 5
  %v273 = vsel %vm115, %v268, %v272
  %v274 = vshrl.u32 %v28, 16
  %v276 = vrot.slane %v274, 4
  %v277 = vor.u32 %v276, %v272
  %v278 = vrot.slane %v277, 4
  %v280 = vshll.u32 %v87, 16
  %v282 = vrot.slane %v280, 5
  %v283 = vsel %vm115, %v278, %v282
  %v285 = vshrl.u32 %v29, 16
  %v287 = vrot.slane %v285, 4
  %v288 = vshll.u32 %v29, 16
  %v290 = vrot.slane %v288, 5
  %v291 = vor.u32 %v287, %v290
  %v292 = vrot.slane %v291, 4
  %v294 = vshll.u32 %v30, 16
  %v296 = vrot.slane %v294, 5
  %v297 = vsel %vm115, %v292, %v296
  %v298 = vshrl.u32 %v30, 16
  %v300 = vrot.slane %v298, 4
  %v301 = vor.u32 %v300, %v296
  %v302 = vrot.slane %v301, 4
  %v304 = vshll.u32 %v88, 16
  %v306 = vrot.slane %v304, 5
  %v307 = vsel %vm115, %v302, %v306
  %v309 = vshrl.u32 %v31, 16
  %v311 = vrot.slane %v309, 4
  %v312 = vshll.u32 %v31, 16
  %v314 = vrot.slane %v312, 5
  %v315 = vor.u32 %v311, %v314
  %v316 = vrot.slane %v315, 4
  %v318 = vshll.u32 %v32, 16
  %v320 = vrot.slane %v318, 5
  %v321 = vsel %vm115, %v316, %v320
  %v322 = vshrl.u32 %v32, 16
  %v324 = vrot.slane %v322, 4
  %v325 = vor.u32 %v324, %v320
  %v326 = vrot.slane %v325, 4
  %v328 = vshll.u32 %v89, 16
  %v330 = vrot.slane %v328, 5
  %v331 = vsel %vm115, %v326, %v330
  %v333 = vshrl.u32 %v33, 16
  %v335 = vrot.slane %v333, 4
  %v336 = vshll.u32 %v33, 16
  %v338 = vrot.slane %v336, 5
  %v339 = vor.u32 %v335, %v338
  %v340 = vrot.slane %v339, 4
  %v342 = vshll.u32 %v34, 16
  %v344 = vrot.slane %v342, 5
  %v345 = vsel %vm115, %v340, %v344
  %v346 = vshrl.u32 %v34, 16
  %v348 = vrot.slane %v346, 4
  %v349 = vor.u32 %v348, %v344
  %v350 = vrot.slane %v349, 4
  %v352 = vshll.u32 %v90, 16
  %v354 = vrot.slane %v352, 5
  %v355 = vsel %vm115, %v350, %v354
  %v357 = vshrl.u32 %v35, 16
  %v359 = vrot.slane %v357, 4
  %v360 = vshll.u32 %v35, 16
  %v362 = vrot.slane %v360, 5
  %v363 = vor.u32 %v359, %v362
  %v364 = vrot.slane %v363, 4
  %v366 = vshll.u32 %v36, 16
  %v368 = vrot.slane %v366, 5
  %v369 = vsel %vm115, %v364, %v368
  %v370 = vshrl.u32 %v36, 16
  %v372 = vrot.slane %v370, 4
  %v373 = vor.u32 %v372, %v368
  %v374 = vrot.slane %v373, 4
  %v376 = vshll.u32 %v91, 16
  %v378 = vrot.slane %v376, 5
  %v379 = vsel %vm115, %v374, %v378
  %v381 = vshrl.u32 %v37, 16
  %v383 = vrot.slane %v381, 4
  %v384 = vshll.u32 %v37, 16
  %v386 = vrot.slane %v384, 5
  %v387 = vor.u32 %v383, %v386
  %v388 = vrot.slane %v387, 4
  %v390 = vshll.u32 %v38, 16
  %v392 = vrot.slane %v390, 5
  %v393 = vsel %vm115, %v388, %v392
  %v394 = vshrl.u32 %v38, 16
  %v396 = vrot.slane %v394, 4
  %v397 = vor.u32 %v396, %v392
  %v398 = vrot.slane %v397, 4
  %v400 = vshll.u32 %v92, 16
  %v402 = vrot.slane %v400, 5
  %v403 = vsel %vm115, %v398, %v402
  %v405 = vshrl.u32 %v39, 16
  %v407 = vrot.slane %v405, 4
  %v408 = vshll.u32 %v39, 16
  %v410 = vrot.slane %v408, 5
  %v411 = vor.u32 %v407, %v410
  %v412 = vrot.slane %v411, 4
  %v414 = vshll.u32 %v40, 16
  %v416 = vrot.slane %v414, 5
  %v417 = vsel %vm115, %v412, %v416
  %v418 = vshrl.u32 %v40, 16
  %v420 = vrot.slane %v418, 4
  %v421 = vor.u32 %v420, %v416
  %v422 = vrot.slane %v421, 4
  %v424 = vshll.u32 %v93, 16
  %v426 = vrot.slane %v424, 5
  %v427 = vsel %vm115, %v422, %v426
  %v429 = vshrl.u32 %v41, 16
  %v431 = vrot.slane %v429, 4
  %v432 = vshll.u32 %v41, 16
  %v434 = vrot.slane %v432, 5
  %v435 = vor.u32 %v431, %v434
  %v436 = vrot.slane %v435, 4
  %v438 = vshll.u32 %v42, 16
  %v440 = vrot.slane %v438, 5
  %v441 = vsel %vm115, %v436, %v440
  %v442 = vshrl.u32 %v42, 16
  %v444 = vrot.slane %v442, 4
  %v445 = vor.u32 %v444, %v440
  %v446 = vrot.slane %v445, 4
  %v448 = vshll.u32 %v94, 16
  %v450 = vrot.slane %v448, 5
  %v451 = vsel %vm115, %v446, %v450
  %v453 = vshrl.u32 %v43, 16
  %v455 = vrot.slane %v453, 4
  %v456 = vshll.u32 %v43, 16
  %v458 = vrot.slane %v456, 5
  %v459 = vor.u32 %v455, %v458
  %v460 = vrot.slane %v459, 4
  %v462 = vshll.u32 %v44, 16
  %v464 = vrot.slane %v462, 5
  %v465 = vsel %vm115, %v460, %v464
  %v466 = vshrl.u32 %v44, 16
  %v468 = vrot.slane %v466, 4
  %v469 = vor.u32 %v468, %v464
  %v470 = vrot.slane %v469, 4
  %v472 = vshll.u32 %v95, 16
  %v474 = vrot.slane %v472, 5
  %v475 = vsel %vm115, %v470, %v474
  %v477 = vshrl.u32 %v45, 16
  %v479 = vrot.slane %v477, 4
  %v480 = vshll.u32 %v45, 16
  %v482 = vrot.slane %v480, 5
  %v483 = vor.u32 %v479, %v482
  %v484 = vrot.slane %v483, 4
  %v486 = vshll.u32 %v46, 16
  %v488 = vrot.slane %v486, 5
  %v489 = vsel %vm115, %v484, %v488
  %v490 = vshrl.u32 %v46, 16
  %v492 = vrot.slane %v490, 4
  %v493 = vor.u32 %v492, %v488
  %v494 = vrot.slane %v493, 4
  %v496 = vshll.u32 %v96, 16
  %v498 = vrot.slane %v496, 5
  %v499 = vsel %vm115, %v494, %v498
  %v501 = vshrl.u32 %v47, 16
  %v503 = vrot.slane %v501, 4
  %v504 = vshll.u32 %v47, 16
  %v506 = vrot.slane %v504, 5
  %v507 = vor.u32 %v503, %v506
  %v508 = vrot.slane %v507, 4
  %v510 = vshll.u32 %v48, 16
  %v512 = vrot.slane %v510, 5
  %v513 = vsel %vm115, %v508, %v512
  %v514 = vshrl.u32 %v48, 16
  %v516 = vrot.slane %v514, 4
  %v517 = vor.u32 %v516, %v512
  %v518 = vrot.slane %v517, 4
  %v520 = vshll.u32 %v97, 16
  %v522 = vrot.slane %v520, 5
  %v523 = vsel %vm115, %v518, %v522
  %v525 = vshrl.u32 %v49, 16
  %v527 = vrot.slane %v525, 4
  %v528 = vshll.u32 %v49, 16
  %v530 = vrot.slane %v528, 5
  %v531 = vor.u32 %v527, %v530
  %v532 = vrot.slane %v531, 4
  %v534 = vshll.u32 %v50, 16
  %v536 = vrot.slane %v534, 5
  %v537 = vsel %vm115, %v532, %v536
  %v538 = vshrl.u32 %v50, 16
  %v540 = vrot.slane %v538, 4
  %v541 = vor.u32 %v540, %v536
  %v542 = vrot.slane %v541, 4
  %v544 = vshll.u32 %v98, 16
  %v546 = vrot.slane %v544, 5
  %v547 = vsel %vm115, %v542, %v546
  %v549 = vshrl.u32 %v51, 16
  %v551 = vrot.slane %v549, 4
  %v552 = vshll.u32 %v51, 16
  %v554 = vrot.slane %v552, 5
  %v555 = vor.u32 %v551, %v554
  %v556 = vrot.slane %v555, 4
  %v558 = vshll.u32 %v52, 16
  %v560 = vrot.slane %v558, 5
  %v561 = vsel %vm115, %v556, %v560
  %v562 = vshrl.u32 %v52, 16
  %v564 = vrot.slane %v562, 4
  %v565 = vor.u32 %v564, %v560
  %v566 = vrot.slane %v565, 4
  %v568 = vshll.u32 %v99, 16
  %v570 = vrot.slane %v568, 5
  %v571 = vsel %vm115, %v566, %v570
  %v573 = vshrl.u32 %v53, 16
  %v575 = vrot.slane %v573, 4
  %v576 = vshll.u32 %v53, 16
  %v578 = vrot.slane %v576, 5
  %v579 = vor.u32 %v575, %v578
  %v580 = vrot.slane %v579, 4
  %v582 = vshll.u32 %v54, 16
  %v584 = vrot.slane %v582, 5
  %v585 = vsel %vm115, %v580, %v584
  %v586 = vshrl.u32 %v54, 16
  %v588 = vrot.slane %v586, 4
  %v589 = vor.u32 %v588, %v584
  %v590 = vrot.slane %v589, 4
  %v592 = vshll.u32 %v100, 16
  %v594 = vrot.slane %v592, 5
  %v595 = vsel %vm115, %v590, %v594
  %v597 = vshrl.u32 %v55, 16
  %v599 = vrot.slane %v597, 4
  %v600 = vshll.u32 %v55, 16
  %v602 = vrot.slane %v600, 5
  %v603 = vor.u32 %v599, %v602
  %v604 = vrot.slane %v603, 4
  %v606 = vshll.u32 %v56, 16
  %v608 = vrot.slane %v606, 5
  %v609 = vsel %vm115, %v604, %v608
  %v610 = vshrl.u32 %v56, 16
  %v612 = vrot.slane %v610, 4
  %v613 = vor.u32 %v612, %v608
  %v614 = vrot.slane %v613, 4
  %v616 = vshll.u32 %v101, 16
  %v618 = vrot.slane %v616, 5
  %v619 = vsel %vm115, %v614, %v618
  %v621 = vshrl.u32 %v57, 16
  %v623 = vrot.slane %v621, 4
  %v624 = vshll.u32 %v57, 16
  %v626 = vrot.slane %v624, 5
  %v627 = vor.u32 %v623, %v626
  %v628 = vrot.slane %v627, 4
  %v630 = vshll.u32 %v58, 16
  %v632 = vrot.slane %v630, 5
  %v633 = vsel %vm115, %v628, %v632
  %v634 = vshrl.u32 %v58, 16
  %v636 = vrot.slane %v634, 4
  %v637 = vor.u32 %v636, %v632
  %v638 = vrot.slane %v637, 4
  %v640 = vshll.u32 %v102, 16
  %v642 = vrot.slane %v640, 5
  %v643 = vsel %vm115, %v638, %v642
  %v645 = vshrl.u32 %v59, 16
  %v647 = vrot.slane %v645, 4
  %v648 = vshll.u32 %v59, 16
  %v650 = vrot.slane %v648, 5
  %v651 = vor.u32 %v647, %v650
  %v652 = vrot.slane %v651, 4
  %v654 = vshll.u32 %v60, 16
  %v656 = vrot.slane %v654, 5
  %v657 = vsel %vm115, %v652, %v656
  %v658 = vshrl.u32 %v60, 16
  %v660 = vrot.slane %v658, 4
  %v661 = vor.u32 %v660, %v656
  %v662 = vrot.slane %v661, 4
  %v664 = vshll.u32 %v103, 16
  %v666 = vrot.slane %v664, 5
  %v667 = vsel %vm115, %v662, %v666
  %v669 = vshrl.u32 %v61, 16
  %v671 = vrot.slane %v669, 4
  %v672 = vshll.u32 %v61, 16
  %v674 = vrot.slane %v672, 5
  %v675 = vor.u32 %v671, %v674
  %v676 = vrot.slane %v675, 4
  %v678 = vshll.u32 %v62, 16
  %v680 = vrot.slane %v678, 5
  %v681 = vsel %vm115, %v676, %v680
  %v682 = vshrl.u32 %v62, 16
  %v684 = vrot.slane %v682, 4
  %v685 = vor.u32 %v684, %v680
  %v686 = vrot.slane %v685, 4
  %v688 = vshll.u32 %v104, 16
  %v690 = vrot.slane %v688, 5
  %v691 = vsel %vm115, %v686, %v690
  %v693 = vshrl.u32 %v63, 16
  %v695 = vrot.slane %v693, 4
  %v696 = vshll.u32 %v63, 16
  %v698 = vrot.slane %v696, 5
  %v699 = vor.u32 %v695, %v698
  %v700 = vrot.slane %v699, 4
  %v702 = vshll.u32 %v64, 16
  %v704 = vrot.slane %v702, 5
  %v705 = vsel %vm115, %v700, %v704
  %v706 = vshrl.u32 %v64, 16
  %v708 = vrot.slane %v706, 4
  %v709 = vor.u32 %v708, %v704
  %v710 = vrot.slane %v709, 4
  %v712 = vshll.u32 %v105, 16
  %v714 = vrot.slane %v712, 5
  %v715 = vsel %vm115, %v710, %v714
  %v717 = vshrl.u32 %v65, 16
  %v719 = vrot.slane %v717, 4
  %v720 = vshll.u32 %v65, 16
  %v722 = vrot.slane %v720, 5
  %v723 = vor.u32 %v719, %v722
  %v724 = vrot.slane %v723, 4
  %v726 = vshll.u32 %v66, 16
  %v728 = vrot.slane %v726, 5
  %v729 = vsel %vm115, %v724, %v728
  %v730 = vshrl.u32 %v66, 16
  %v732 = vrot.slane %v730, 4
  %v733 = vor.u32 %v732, %v728
  %v734 = vrot.slane %v733, 4
  %v736 = vshll.u32 %v106, 16
  %v738 = vrot.slane %v736, 5
  %v739 = vsel %vm115, %v734, %v738
  %v741 = vshrl.u32 %v67, 16
  %v743 = vrot.slane %v741, 4
  %v744 = vshll.u32 %v67, 16
  %v746 = vrot.slane %v744, 5
  %v747 = vor.u32 %v743, %v746
  %v748 = vrot.slane %v747, 4
  %v750 = vshll.u32 %v68, 16
  %v752 = vrot.slane %v750, 5
  %v753 = vsel %vm115, %v748, %v752
  %v754 = vshrl.u32 %v68, 16
  %v756 = vrot.slane %v754, 4
  %v757 = vor.u32 %v756, %v752
  %v758 = vrot.slane %v757, 4
  %v760 = vshll.u32 %v107, 16
  %v762 = vrot.slane %v760, 5
  %v763 = vsel %vm115, %v758, %v762
  %v765 = vshrl.u32 %v69, 16
  %v767 = vrot.slane %v765, 4
  %v768 = vshll.u32 %v69, 16
  %v770 = vrot.slane %v768, 5
  %v771 = vor.u32 %v767, %v770
  %v772 = vrot.slane %v771, 4
  %v774 = vshll.u32 %v70, 16
  %v776 = vrot.slane %v774, 5
  %v777 = vsel %vm115, %v772, %v776
  %v778 = vshrl.u32 %v70, 16
  %v780 = vrot.slane %v778, 4
  %v781 = vor.u32 %v780, %v776
  %v782 = vrot.slane %v781, 4
  %v784 = vshll.u32 %v108, 16
  %v786 = vrot.slane %v784, 5
  %v787 = vsel %vm115, %v782, %v786
  %v789 = vshrl.u32 %v71, 16
  %v791 = vrot.slane %v789, 4
  %v792 = vshll.u32 %v71, 16
  %v794 = vrot.slane %v792, 5
  %v795 = vor.u32 %v791, %v794
  %v796 = vrot.slane %v795, 4
  %v798 = vshll.u32 %v72, 16
  %v800 = vrot.slane %v798, 5
  %v801 = vsel %vm115, %v796, %v800
  %v802 = vshrl.u32 %v72, 16
  %v804 = vrot.slane %v802, 4
  %v805 = vor.u32 %v804, %v800
  %v806 = vrot.slane %v805, 4
  %v808 = vshll.u32 %v109, 16
  %v810 = vrot.slane %v808, 5
  %v811 = vsel %vm115, %v806, %v810
  %v813 = vshrl.u32 %v73, 16
  %v815 = vrot.slane %v813, 4
  %v816 = vshll.u32 %v73, 16
  %v818 = vrot.slane %v816, 5
  %v819 = vor.u32 %v815, %v818
  %v820 = vrot.slane %v819, 4
  %v822 = vshll.u32 %v74, 16
  %v824 = vrot.slane %v822, 5
  %v825 = vsel %vm115, %v820, %v824
  %v826 = vshrl.u32 %v74, 16
  %v828 = vrot.slane %v826, 4
  %v829 = vor.u32 %v828, %v824
  %v830 = vrot.slane %v829, 4
  %v832 = vshll.u32 %v110, 16
  %v834 = vrot.slane %v832, 5
  %v835 = vsel %vm115, %v830, %v834
  %v837 = vshrl.u32 %v75, 16
  %v839 = vrot.slane %v837, 4
  %v840 = vshll.u32 %v75, 16
  %v842 = vrot.slane %v840, 5
  %v843 = vor.u32 %v839, %v842
  %v844 = vrot.slane %v843, 4
  %v846 = vshll.u32 %v76, 16
  %v848 = vrot.slane %v846, 5
  %v849 = vsel %vm115, %v844, %v848
  %v850 = vshrl.u32 %v76, 16
  %v852 = vrot.slane %v850, 4
  %v853 = vor.u32 %v852, %v848
  %v854 = vrot.slane %v853, 4
  %v856 = vshll.u32 %v111, 16
  %v858 = vrot.slane %v856, 5
  %v859 = vsel %vm115, %v854, %v858
  %v861 = vshrl.u32 %v77, 16
  %v863 = vrot.slane %v861, 4
  %v864 = vshll.u32 %v77, 16
  %v866 = vrot.slane %v864, 5
  %v867 = vor.u32 %v863, %v866
  %v868 = vrot.slane %v867, 4
  %v870 = vshll.u32 %v78, 16
  %v872 = vrot.slane %v870, 5
  %v873 = vsel %vm115, %v868, %v872
  %v874 = vshrl.u32 %v78, 16
  %v876 = vrot.slane %v874, 4
  %v877 = vor.u32 %v876, %v872
  %v878 = vrot.slane %v877, 4
  %v880 = vshll.u32 %v112, 16
  %v882 = vrot.slane %v880, 5
  %v883 = vsel %vm115, %v878, %v882
  %s884 = scalar_lea.vmem %s1, 8
  %v885 = vld [vmem:[%s884] sm:$0xf]
  %v886 = vld [vmem:[%s884 + $0x4] sm:$0x3]
  %v887 = vunpack.c.l.b16 %v129
  %v888 = vunpack.c.l.b16 %v139
  %v889 = vunpack.c.l.b16 %v153
  %v890 = vunpack.c.l.b16 %v163
  %v891 = vunpack.c.l.b16 %v177
  %v892 = vunpack.c.l.b16 %v187
  %v893 = vunpack.c.l.b16 %v201
  %v894 = vunpack.c.l.b16 %v211
  %v895 = vunpack.c.l.b16 %v225
  %v896 = vunpack.c.l.b16 %v235
  %v897 = vunpack.c.l.b16 %v249
  %v898 = vunpack.c.l.b16 %v259
  %v899 = vunpack.c.l.b16 %v273
  %v900 = vunpack.c.l.b16 %v283
  %v901 = vunpack.c.l.b16 %v297
  %v902 = vunpack.c.l.b16 %v307
  %v903 = vunpack.c.l.b16 %v321
  %v904 = vunpack.c.l.b16 %v331
  %v905 = vunpack.c.l.b16 %v345
  %v906 = vunpack.c.l.b16 %v355
  %v907 = vunpack.c.l.b16 %v369
  %v908 = vunpack.c.l.b16 %v379
  %v909 = vunpack.c.l.b16 %v393
  %v910 = vunpack.c.l.b16 %v403
  %v911 = vunpack.c.l.b16 %v417
  %v912 = vunpack.c.l.b16 %v427
  %v913 = vunpack.c.l.b16 %v441
  %v914 = vunpack.c.l.b16 %v451
  %v915 = vunpack.c.l.b16 %v465
  %v916 = vunpack.c.l.b16 %v475
  %v917 = vunpack.c.l.b16 %v489
  %v918 = vunpack.c.l.b16 %v499
  %v919 = vunpack.c.l.b16 %v513
  %v920 = vunpack.c.l.b16 %v523
  %v921 = vunpack.c.l.b16 %v537
  %v922 = vunpack.c.l.b16 %v547
  %v923 = vunpack.c.l.b16 %v561
  %v924 = vunpack.c.l.b16 %v571
  %v925 = vunpack.c.l.b16 %v585
  %v926 = vunpack.c.l.b16 %v595
  %v927 = vunpack.c.l.b16 %v609
  %v928 = vunpack.c.l.b16 %v619
  %v929 = vunpack.c.l.b16 %v633
  %v930 = vunpack.c.l.b16 %v643
  %v931 = vunpack.c.l.b16 %v657
  %v932 = vunpack.c.l.b16 %v667
  %v933 = vunpack.c.l.b16 %v681
  %v934 = vunpack.c.l.b16 %v691
  %v935 = vunpack.c.l.b16 %v705
  %v936 = vunpack.c.l.b16 %v715
  %v937 = vunpack.c.l.b16 %v729
  %v938 = vunpack.c.l.b16 %v739
  %v939 = vunpack.c.l.b16 %v753
  %v940 = vunpack.c.l.b16 %v763
  %v941 = vunpack.c.l.b16 %v777
  %v942 = vunpack.c.l.b16 %v787
  %v943 = vunpack.c.l.b16 %v801
  %v944 = vunpack.c.l.b16 %v811
  %v945 = vunpack.c.l.b16 %v825
  %v946 = vunpack.c.l.b16 %v835
  %v947 = vunpack.c.l.b16 %v849
  %v948 = vunpack.c.l.b16 %v859
  %v949 = vunpack.c.l.b16 %v873
  %v950 = vunpack.c.l.b16 %v883
  %v951 = vpack.c.b16 %v888, %v887
  %v952 = vpack.c.b16 %v890, %v889
  %v953 = vpack.c.b16 %v892, %v891
  %v954 = vpack.c.b16 %v894, %v893
  %v955 = vpack.c.b16 %v896, %v895
  %v956 = vpack.c.b16 %v898, %v897
  %v957 = vpack.c.b16 %v900, %v899
  %v958 = vpack.c.b16 %v902, %v901
  %v959 = vpack.c.b16 %v904, %v903
  %v960 = vpack.c.b16 %v906, %v905
  %v961 = vpack.c.b16 %v908, %v907
  %v962 = vpack.c.b16 %v910, %v909
  %v963 = vpack.c.b16 %v912, %v911
  %v964 = vpack.c.b16 %v914, %v913
  %v965 = vpack.c.b16 %v916, %v915
  %v966 = vpack.c.b16 %v918, %v917
  %v967 = vpack.c.b16 %v920, %v919
  %v968 = vpack.c.b16 %v922, %v921
  %v969 = vpack.c.b16 %v924, %v923
  %v970 = vpack.c.b16 %v926, %v925
  %v971 = vpack.c.b16 %v928, %v927
  %v972 = vpack.c.b16 %v930, %v929
  %v973 = vpack.c.b16 %v932, %v931
  %v974 = vpack.c.b16 %v934, %v933
  %v975 = vpack.c.b16 %v936, %v935
  %v976 = vpack.c.b16 %v938, %v937
  %v977 = vpack.c.b16 %v940, %v939
  %v978 = vpack.c.b16 %v942, %v941
  %v979 = vpack.c.b16 %v944, %v943
  %v980 = vpack.c.b16 %v946, %v945
  %v981 = vpack.c.b16 %v948, %v947
  %v982 = vpack.c.b16 %v950, %v949
  %v985 = vunpack.c.l.b16 %v885
  %v986 = vunpack.c.l.b16 %v886
  %v987 = vpack.c.b16 %v986, %v985
  %vm988 = vcmask 97280
  %v990 = vsel %vm988, %v951, 0
  %v993 = vsel %vm988, %v952, 0
  %v996 = vsel %vm988, %v953, 0
  %v999 = vsel %vm988, %v954, 0
  %v1002 = vsel %vm988, %v955, 0
  %v1005 = vsel %vm988, %v956, 0
  %v1008 = vsel %vm988, %v957, 0
  %v1011 = vsel %vm988, %v958, 0
  %v1014 = vsel %vm988, %v959, 0
  %v1017 = vsel %vm988, %v960, 0
  %v1020 = vsel %vm988, %v961, 0
  %v1023 = vsel %vm988, %v962, 0
  %v1026 = vsel %vm988, %v963, 0
  %v1029 = vsel %vm988, %v964, 0
  %v1032 = vsel %vm988, %v965, 0
  %v1035 = vsel %vm988, %v966, 0
  %v1038 = vsel %vm988, %v967, 0
  %v1041 = vsel %vm988, %v968, 0
  %v1044 = vsel %vm988, %v969, 0
  %v1047 = vsel %vm988, %v970, 0
  %v1050 = vsel %vm988, %v971, 0
  %v1053 = vsel %vm988, %v972, 0
  %v1056 = vsel %vm988, %v973, 0
  %v1059 = vsel %vm988, %v974, 0
  %v1062 = vsel %vm988, %v975, 0
  %v1065 = vsel %vm988, %v976, 0
  %v1068 = vsel %vm988, %v977, 0
  %v1071 = vsel %vm988, %v978, 0
  %v1074 = vsel %vm988, %v979, 0
  %v1077 = vsel %vm988, %v980, 0
  %v1080 = vsel %vm988, %v981, 0
  %v1083 = vsel %vm988, %v982, 0
  %vm1085 = vcmask 1045504
  %v1087 = vsel %vm1085, %v987, 0
  %1089 = vmatprep.subr.bf16.mxu0 0
  %1090 = vmatpush1.bf16.msra.mxu0 0
  %1091 = vmatprep.subr.bf16.mxu0 0
  %1092 = vmatpush1.bf16.msra.mxu0 0
  %1093 = vmatprep.subr.bf16.mxu0 0
  %1094 = vmatpush1.bf16.msra.mxu0 0
  %1095 = vmatprep.subr.bf16.mxu0 0
  %1096 = vmatpush1.bf16.msra.mxu0 0
  %1097 = vmatprep.subr.bf16.mxu0 0
  %1098 = vmatpush1.bf16.msra.mxu0 0
  %1099 = vmatprep.subr.bf16.mxu0 0
  %1100 = vmatpush1.bf16.msra.mxu0 0
  %1101 = vmatprep.subr.bf16.mxu0 0
  %1102 = vmatpush1.bf16.msra.mxu0 0
  %1103 = vmatprep.subr.bf16.mxu0 0
  %1104 = vmatpush1.bf16.msra.mxu0 %v1087
  %1105 = vmatprep.subr.bf16.mxu0 0
  %1106 = vmatpush2.bf16.msra.mxu0 0
  %1107 = vmatprep.subr.bf16.mxu0 0
  %1108 = vmatpush2.bf16.msra.mxu0 0
  %1109 = vmatprep.subr.bf16.mxu0 0
  %1110 = vmatpush2.bf16.msra.mxu0 0
  %1111 = vmatprep.subr.bf16.mxu0 0
  %1112 = vmatpush2.bf16.msra.mxu0 0
  %1113 = vmatprep.subr.bf16.mxu0 0
  %1114 = vmatpush2.bf16.msra.mxu0 0
  %1115 = vmatprep.subr.bf16.mxu0 0
  %1116 = vmatpush2.bf16.msra.mxu0 0
  %1117 = vmatprep.subr.bf16.mxu0 0
  %1118 = vmatpush2.bf16.msra.mxu0 0
  %1119 = vmatprep.subr.bf16.mxu0 0
  %1120 = vmatpush2.bf16.msra.mxu0 0
  %1121 = vmatprep.mubr.bf16.mxu0 0
  %1122 = vmatmul.mubr.bf16.gmra.mxu0 %v990
  %v1123 = vpop.f32.mrf.mxu0
  %v1124 = vadd.f32 0.0, %v1123
  %v1125 = vpop.f32.mrf.mxu0
  %v1126 = vpop.f32.mrf.mxu0
  %v1127 = vadd.f32 0.0, %v1126
  %v1128 = vpop.f32.mrf.mxu0
  %1129 = vmatprep.mubr.bf16.mxu0 0
  %1130 = vmatmul.mubr.bf16.gmra.mxu0 %v993
  %v1131 = vpop.f32.mrf.mxu0
  %v1132 = vadd.f32 0.0, %v1131
  %v1133 = vpop.f32.mrf.mxu0
  %v1134 = vpop.f32.mrf.mxu0
  %v1135 = vadd.f32 0.0, %v1134
  %v1136 = vpop.f32.mrf.mxu0
  %1137 = vmatprep.mubr.bf16.mxu0 0
  %1138 = vmatmul.mubr.bf16.gmra.mxu0 %v996
  %v1139 = vpop.f32.mrf.mxu0
  %v1140 = vadd.f32 0.0, %v1139
  %v1141 = vpop.f32.mrf.mxu0
  %v1142 = vpop.f32.mrf.mxu0
  %v1143 = vadd.f32 0.0, %v1142
  %v1144 = vpop.f32.mrf.mxu0
  %1145 = vmatprep.mubr.bf16.mxu0 0
  %1146 = vmatmul.mubr.bf16.gmra.mxu0 %v999
  %v1147 = vpop.f32.mrf.mxu0
  %v1148 = vadd.f32 0.0, %v1147
  %v1149 = vpop.f32.mrf.mxu0
  %v1150 = vpop.f32.mrf.mxu0
  %v1151 = vadd.f32 0.0, %v1150
  %v1152 = vpop.f32.mrf.mxu0
  %1153 = vmatprep.mubr.bf16.mxu0 0
  %1154 = vmatmul.mubr.bf16.gmra.mxu0 %v1002
  %v1155 = vpop.f32.mrf.mxu0
  %v1156 = vadd.f32 0.0, %v1155
  %v1157 = vpop.f32.mrf.mxu0
  %v1158 = vpop.f32.mrf.mxu0
  %v1159 = vadd.f32 0.0, %v1158
  %v1160 = vpop.f32.mrf.mxu0
  %1161 = vmatprep.mubr.bf16.mxu0 0
  %1162 = vmatmul.mubr.bf16.gmra.mxu0 %v1005
  %v1163 = vpop.f32.mrf.mxu0
  %v1164 = vadd.f32 0.0, %v1163
  %v1165 = vpop.f32.mrf.mxu0
  %v1166 = vpop.f32.mrf.mxu0
  %v1167 = vadd.f32 0.0, %v1166
  %v1168 = vpop.f32.mrf.mxu0
  %1169 = vmatprep.mubr.bf16.mxu0 0
  %1170 = vmatmul.mubr.bf16.gmra.mxu0 %v1008
  %v1171 = vpop.f32.mrf.mxu0
  %v1172 = vadd.f32 0.0, %v1171
  %v1173 = vpop.f32.mrf.mxu0
  %v1174 = vpop.f32.mrf.mxu0
  %v1175 = vadd.f32 0.0, %v1174
  %v1176 = vpop.f32.mrf.mxu0
  %1177 = vmatprep.mubr.bf16.mxu0 0
  %1178 = vmatmul.mubr.bf16.gmra.mxu0 %v1011
  %v1179 = vpop.f32.mrf.mxu0
  %v1180 = vadd.f32 0.0, %v1179
  %v1181 = vpop.f32.mrf.mxu0
  %v1182 = vpop.f32.mrf.mxu0
  %v1183 = vadd.f32 0.0, %v1182
  %v1184 = vpop.f32.mrf.mxu0
  %1185 = vmatprep.mubr.bf16.mxu0 0
  %1186 = vmatmul.mubr.bf16.gmra.mxu0 %v1014
  %v1187 = vpop.f32.mrf.mxu0
  %v1188 = vadd.f32 0.0, %v1187
  %v1189 = vpop.f32.mrf.mxu0
  %v1190 = vpop.f32.mrf.mxu0
  %v1191 = vadd.f32 0.0, %v1190
  %v1192 = vpop.f32.mrf.mxu0
  %1193 = vmatprep.mubr.bf16.mxu0 0
  %1194 = vmatmul.mubr.bf16.gmra.mxu0 %v1017
  %v1195 = vpop.f32.mrf.mxu0
  %v1196 = vadd.f32 0.0, %v1195
  %v1197 = vpop.f32.mrf.mxu0
  %v1198 = vpop.f32.mrf.mxu0
  %v1199 = vadd.f32 0.0, %v1198
  %v1200 = vpop.f32.mrf.mxu0
  %1201 = vmatprep.mubr.bf16.mxu0 0
  %1202 = vmatmul.mubr.bf16.gmra.mxu0 %v1020
  %v1203 = vpop.f32.mrf.mxu0
  %v1204 = vadd.f32 0.0, %v1203
  %v1205 = vpop.f32.mrf.mxu0
  %v1206 = vpop.f32.mrf.mxu0
  %v1207 = vadd.f32 0.0, %v1206
  %v1208 = vpop.f32.mrf.mxu0
  %1209 = vmatprep.mubr.bf16.mxu0 0
  %1210 = vmatmul.mubr.bf16.gmra.mxu0 %v1023
  %v1211 = vpop.f32.mrf.mxu0
  %v1212 = vadd.f32 0.0, %v1211
  %v1213 = vpop.f32.mrf.mxu0
  %v1214 = vpop.f32.mrf.mxu0
  %v1215 = vadd.f32 0.0, %v1214
  %v1216 = vpop.f32.mrf.mxu0
  %1217 = vmatprep.mubr.bf16.mxu0 0
  %1218 = vmatmul.mubr.bf16.gmra.mxu0 %v1026
  %v1219 = vpop.f32.mrf.mxu0
  %v1220 = vadd.f32 0.0, %v1219
  %v1221 = vpop.f32.mrf.mxu0
  %v1222 = vpop.f32.mrf.mxu0
  %v1223 = vadd.f32 0.0, %v1222
  %v1224 = vpop.f32.mrf.mxu0
  %1225 = vmatprep.mubr.bf16.mxu0 0
  %1226 = vmatmul.mubr.bf16.gmra.mxu0 %v1029
  %v1227 = vpop.f32.mrf.mxu0
  %v1228 = vadd.f32 0.0, %v1227
  %v1229 = vpop.f32.mrf.mxu0
  %v1230 = vpop.f32.mrf.mxu0
  %v1231 = vadd.f32 0.0, %v1230
  %v1232 = vpop.f32.mrf.mxu0
  %1233 = vmatprep.mubr.bf16.mxu0 0
  %1234 = vmatmul.mubr.bf16.gmra.mxu0 %v1032
  %v1235 = vpop.f32.mrf.mxu0
  %v1236 = vadd.f32 0.0, %v1235
  %v1237 = vpop.f32.mrf.mxu0
  %v1238 = vpop.f32.mrf.mxu0
  %v1239 = vadd.f32 0.0, %v1238
  %v1240 = vpop.f32.mrf.mxu0
  %1241 = vmatprep.mubr.bf16.mxu0 0
  %1242 = vmatmul.mubr.bf16.gmra.mxu0 %v1035
  %v1243 = vpop.f32.mrf.mxu0
  %v1244 = vadd.f32 0.0, %v1243
  %v1245 = vpop.f32.mrf.mxu0
  %v1246 = vpop.f32.mrf.mxu0
  %v1247 = vadd.f32 0.0, %v1246
  %v1248 = vpop.f32.mrf.mxu0
  %1249 = vmatprep.mubr.bf16.mxu0 0
  %1250 = vmatmul.mubr.bf16.gmra.mxu0 %v1038
  %v1251 = vpop.f32.mrf.mxu0
  %v1252 = vadd.f32 0.0, %v1251
  %v1253 = vpop.f32.mrf.mxu0
  %v1254 = vpop.f32.mrf.mxu0
  %v1255 = vadd.f32 0.0, %v1254
  %v1256 = vpop.f32.mrf.mxu0
  %1257 = vmatprep.mubr.bf16.mxu0 0
  %1258 = vmatmul.mubr.bf16.gmra.mxu0 %v1041
  %v1259 = vpop.f32.mrf.mxu0
  %v1260 = vadd.f32 0.0, %v1259
  %v1261 = vpop.f32.mrf.mxu0
  %v1262 = vpop.f32.mrf.mxu0
  %v1263 = vadd.f32 0.0, %v1262
  %v1264 = vpop.f32.mrf.mxu0
  %1265 = vmatprep.mubr.bf16.mxu0 0
  %1266 = vmatmul.mubr.bf16.gmra.mxu0 %v1044
  %v1267 = vpop.f32.mrf.mxu0
  %v1268 = vadd.f32 0.0, %v1267
  %v1269 = vpop.f32.mrf.mxu0
  %v1270 = vpop.f32.mrf.mxu0
  %v1271 = vadd.f32 0.0, %v1270
  %v1272 = vpop.f32.mrf.mxu0
  %1273 = vmatprep.mubr.bf16.mxu0 0
  %1274 = vmatmul.mubr.bf16.gmra.mxu0 %v1047
  %v1275 = vpop.f32.mrf.mxu0
  %v1276 = vadd.f32 0.0, %v1275
  %v1277 = vpop.f32.mrf.mxu0
  %v1278 = vpop.f32.mrf.mxu0
  %v1279 = vadd.f32 0.0, %v1278
  %v1280 = vpop.f32.mrf.mxu0
  %1281 = vmatprep.mubr.bf16.mxu0 0
  %1282 = vmatmul.mubr.bf16.gmra.mxu0 %v1050
  %v1283 = vpop.f32.mrf.mxu0
  %v1284 = vadd.f32 0.0, %v1283
  %v1285 = vpop.f32.mrf.mxu0
  %v1286 = vpop.f32.mrf.mxu0
  %v1287 = vadd.f32 0.0, %v1286
  %v1288 = vpop.f32.mrf.mxu0
  %1289 = vmatprep.mubr.bf16.mxu0 0
  %1290 = vmatmul.mubr.bf16.gmra.mxu0 %v1053
  %v1291 = vpop.f32.mrf.mxu0
  %v1292 = vadd.f32 0.0, %v1291
  %v1293 = vpop.f32.mrf.mxu0
  %v1294 = vpop.f32.mrf.mxu0
  %v1295 = vadd.f32 0.0, %v1294
  %v1296 = vpop.f32.mrf.mxu0
  %1297 = vmatprep.mubr.bf16.mxu0 0
  %1298 = vmatmul.mubr.bf16.gmra.mxu0 %v1056
  %v1299 = vpop.f32.mrf.mxu0
  %v1300 = vadd.f32 0.0, %v1299
  %v1301 = vpop.f32.mrf.mxu0
  %v1302 = vpop.f32.mrf.mxu0
  %v1303 = vadd.f32 0.0, %v1302
  %v1304 = vpop.f32.mrf.mxu0
  %1305 = vmatprep.mubr.bf16.mxu0 0
  %1306 = vmatmul.mubr.bf16.gmra.mxu0 %v1059
  %v1307 = vpop.f32.mrf.mxu0
  %v1308 = vadd.f32 0.0, %v1307
  %v1309 = vpop.f32.mrf.mxu0
  %v1310 = vpop.f32.mrf.mxu0
  %v1311 = vadd.f32 0.0, %v1310
  %v1312 = vpop.f32.mrf.mxu0
  %1313 = vmatprep.mubr.bf16.mxu0 0
  %1314 = vmatmul.mubr.bf16.gmra.mxu0 %v1062
  %v1315 = vpop.f32.mrf.mxu0
  %v1316 = vadd.f32 0.0, %v1315
  %v1317 = vpop.f32.mrf.mxu0
  %v1318 = vpop.f32.mrf.mxu0
  %v1319 = vadd.f32 0.0, %v1318
  %v1320 = vpop.f32.mrf.mxu0
  %1321 = vmatprep.mubr.bf16.mxu0 0
  %1322 = vmatmul.mubr.bf16.gmra.mxu0 %v1065
  %v1323 = vpop.f32.mrf.mxu0
  %v1324 = vadd.f32 0.0, %v1323
  %v1325 = vpop.f32.mrf.mxu0
  %v1326 = vpop.f32.mrf.mxu0
  %v1327 = vadd.f32 0.0, %v1326
  %v1328 = vpop.f32.mrf.mxu0
  %1329 = vmatprep.mubr.bf16.mxu0 0
  %1330 = vmatmul.mubr.bf16.gmra.mxu0 %v1068
  %v1331 = vpop.f32.mrf.mxu0
  %v1332 = vadd.f32 0.0, %v1331
  %v1333 = vpop.f32.mrf.mxu0
  %v1334 = vpop.f32.mrf.mxu0
  %v1335 = vadd.f32 0.0, %v1334
  %v1336 = vpop.f32.mrf.mxu0
  %1337 = vmatprep.mubr.bf16.mxu0 0
  %1338 = vmatmul.mubr.bf16.gmra.mxu0 %v1071
  %v1339 = vpop.f32.mrf.mxu0
  %v1340 = vadd.f32 0.0, %v1339
  %v1341 = vpop.f32.mrf.mxu0
  %v1342 = vpop.f32.mrf.mxu0
  %v1343 = vadd.f32 0.0, %v1342
  %v1344 = vpop.f32.mrf.mxu0
  %1345 = vmatprep.mubr.bf16.mxu0 0
  %1346 = vmatmul.mubr.bf16.gmra.mxu0 %v1074
  %v1347 = vpop.f32.mrf.mxu0
  %v1348 = vadd.f32 0.0, %v1347
  %v1349 = vpop.f32.mrf.mxu0
  %v1350 = vpop.f32.mrf.mxu0
  %v1351 = vadd.f32 0.0, %v1350
  %v1352 = vpop.f32.mrf.mxu0
  %1353 = vmatprep.mubr.bf16.mxu0 0
  %1354 = vmatmul.mubr.bf16.gmra.mxu0 %v1077
  %v1355 = vpop.f32.mrf.mxu0
  %v1356 = vadd.f32 0.0, %v1355
  %v1357 = vpop.f32.mrf.mxu0
  %v1358 = vpop.f32.mrf.mxu0
  %v1359 = vadd.f32 0.0, %v1358
  %v1360 = vpop.f32.mrf.mxu0
  %1361 = vmatprep.mubr.bf16.mxu0 0
  %1362 = vmatmul.mubr.bf16.gmra.mxu0 %v1080
  %v1363 = vpop.f32.mrf.mxu0
  %v1364 = vadd.f32 0.0, %v1363
  %v1365 = vpop.f32.mrf.mxu0
  %v1366 = vpop.f32.mrf.mxu0
  %v1367 = vadd.f32 0.0, %v1366
  %v1368 = vpop.f32.mrf.mxu0
  %1369 = vmatprep.mubr.bf16.mxu0 0
  %1370 = vmatmul.mubr.bf16.gmra.mxu0 %v1083
  %v1371 = vpop.f32.mrf.mxu0
  %v1372 = vadd.f32 0.0, %v1371
  %v1373 = vpop.f32.mrf.mxu0
  %v1374 = vpop.f32.mrf.mxu0
  %v1375 = vadd.f32 0.0, %v1374
  %v1376 = vpop.f32.mrf.mxu0
  %1377 = vdwg.mxu0
  %v1442 = vunpack.c.l.b16 %v15
  %v1443 = vunpack.c.l.b16 %v16
  %v1444 = vunpack.c.l.b16 %v17
  %v1445 = vunpack.c.l.b16 %v18
  %v1446 = vunpack.c.l.b16 %v19
  %v1447 = vunpack.c.l.b16 %v20
  %v1448 = vunpack.c.l.b16 %v21
  %v1449 = vunpack.c.l.b16 %v22
  %v1450 = vunpack.c.l.b16 %v23
  %v1451 = vunpack.c.l.b16 %v24
  %v1452 = vunpack.c.l.b16 %v25
  %v1453 = vunpack.c.l.b16 %v26
  %v1454 = vunpack.c.l.b16 %v27
  %v1455 = vunpack.c.l.b16 %v28
  %v1456 = vunpack.c.l.b16 %v29
  %v1457 = vunpack.c.l.b16 %v30
  %v1458 = vunpack.c.l.b16 %v31
  %v1459 = vunpack.c.l.b16 %v32
  %v1460 = vunpack.c.l.b16 %v33
  %v1461 = vunpack.c.l.b16 %v34
  %v1462 = vunpack.c.l.b16 %v35
  %v1463 = vunpack.c.l.b16 %v36
  %v1464 = vunpack.c.l.b16 %v37
  %v1465 = vunpack.c.l.b16 %v38
  %v1466 = vunpack.c.l.b16 %v39
  %v1467 = vunpack.c.l.b16 %v40
  %v1468 = vunpack.c.l.b16 %v41
  %v1469 = vunpack.c.l.b16 %v42
  %v1470 = vunpack.c.l.b16 %v43
  %v1471 = vunpack.c.l.b16 %v44
  %v1472 = vunpack.c.l.b16 %v45
  %v1473 = vunpack.c.l.b16 %v46
  %v1474 = vunpack.c.l.b16 %v47
  %v1475 = vunpack.c.l.b16 %v48
  %v1476 = vunpack.c.l.b16 %v49
  %v1477 = vunpack.c.l.b16 %v50
  %v1478 = vunpack.c.l.b16 %v51
  %v1479 = vunpack.c.l.b16 %v52
  %v1480 = vunpack.c.l.b16 %v53
  %v1481 = vunpack.c.l.b16 %v54
  %v1482 = vunpack.c.l.b16 %v55
  %v1483 = vunpack.c.l.b16 %v56
  %v1484 = vunpack.c.l.b16 %v57
  %v1485 = vunpack.c.l.b16 %v58
  %v1486 = vunpack.c.l.b16 %v59
  %v1487 = vunpack.c.l.b16 %v60
  %v1488 = vunpack.c.l.b16 %v61
  %v1489 = vunpack.c.l.b16 %v62
  %v1490 = vunpack.c.l.b16 %v63
  %v1491 = vunpack.c.l.b16 %v64
  %v1492 = vunpack.c.l.b16 %v65
  %v1493 = vunpack.c.l.b16 %v66
  %v1494 = vunpack.c.l.b16 %v67
  %v1495 = vunpack.c.l.b16 %v68
  %v1496 = vunpack.c.l.b16 %v69
  %v1497 = vunpack.c.l.b16 %v70
  %v1498 = vunpack.c.l.b16 %v71
  %v1499 = vunpack.c.l.b16 %v72
  %v1500 = vunpack.c.l.b16 %v73
  %v1501 = vunpack.c.l.b16 %v74
  %v1502 = vunpack.c.l.b16 %v75
  %v1503 = vunpack.c.l.b16 %v76
  %v1504 = vunpack.c.l.b16 %v77
  %v1505 = vunpack.c.l.b16 %v78
  %v1506 = vpack.c.b16 %v1443, %v1442
  %v1507 = vpack.c.b16 %v1445, %v1444
  %v1508 = vpack.c.b16 %v1447, %v1446
  %v1509 = vpack.c.b16 %v1449, %v1448
  %v1510 = vpack.c.b16 %v1451, %v1450
  %v1511 = vpack.c.b16 %v1453, %v1452
  %v1512 = vpack.c.b16 %v1455, %v1454
  %v1513 = vpack.c.b16 %v1457, %v1456
  %v1514 = vpack.c.b16 %v1459, %v1458
  %v1515 = vpack.c.b16 %v1461, %v1460
  %v1516 = vpack.c.b16 %v1463, %v1462
  %v1517 = vpack.c.b16 %v1465, %v1464
  %v1518 = vpack.c.b16 %v1467, %v1466
  %v1519 = vpack.c.b16 %v1469, %v1468
  %v1520 = vpack.c.b16 %v1471, %v1470
  %v1521 = vpack.c.b16 %v1473, %v1472
  %v1522 = vpack.c.b16 %v1475, %v1474
  %v1523 = vpack.c.b16 %v1477, %v1476
  %v1524 = vpack.c.b16 %v1479, %v1478
  %v1525 = vpack.c.b16 %v1481, %v1480
  %v1526 = vpack.c.b16 %v1483, %v1482
  %v1527 = vpack.c.b16 %v1485, %v1484
  %v1528 = vpack.c.b16 %v1487, %v1486
  %v1529 = vpack.c.b16 %v1489, %v1488
  %v1530 = vpack.c.b16 %v1491, %v1490
  %v1531 = vpack.c.b16 %v1493, %v1492
  %v1532 = vpack.c.b16 %v1495, %v1494
  %v1533 = vpack.c.b16 %v1497, %v1496
  %v1534 = vpack.c.b16 %v1499, %v1498
  %v1535 = vpack.c.b16 %v1501, %v1500
  %v1536 = vpack.c.b16 %v1503, %v1502
  %v1537 = vpack.c.b16 %v1505, %v1504
  %v1540 = vunpack.c.l.b16 %v79
  %v1541 = vunpack.c.l.b16 %v80
  %v1542 = vpack.c.b16 %v1541, %v1540
  %v1544 = vsel %vm988, %v1506, 0
  %v1547 = vsel %vm988, %v1507, 0
  %v1550 = vsel %vm988, %v1508, 0
  %v1553 = vsel %vm988, %v1509, 0
  %v1556 = vsel %vm988, %v1510, 0
  %v1559 = vsel %vm988, %v1511, 0
  %v1562 = vsel %vm988, %v1512, 0
  %v1565 = vsel %vm988, %v1513, 0
  %v1568 = vsel %vm988, %v1514, 0
  %v1571 = vsel %vm988, %v1515, 0
  %v1574 = vsel %vm988, %v1516, 0
  %v1577 = vsel %vm988, %v1517, 0
  %v1580 = vsel %vm988, %v1518, 0
  %v1583 = vsel %vm988, %v1519, 0
  %v1586 = vsel %vm988, %v1520, 0
  %v1589 = vsel %vm988, %v1521, 0
  %v1592 = vsel %vm988, %v1522, 0
  %v1595 = vsel %vm988, %v1523, 0
  %v1598 = vsel %vm988, %v1524, 0
  %v1601 = vsel %vm988, %v1525, 0
  %v1604 = vsel %vm988, %v1526, 0
  %v1607 = vsel %vm988, %v1527, 0
  %v1610 = vsel %vm988, %v1528, 0
  %v1613 = vsel %vm988, %v1529, 0
  %v1616 = vsel %vm988, %v1530, 0
  %v1619 = vsel %vm988, %v1531, 0
  %v1622 = vsel %vm988, %v1532, 0
  %v1625 = vsel %vm988, %v1533, 0
  %v1628 = vsel %vm988, %v1534, 0
  %v1631 = vsel %vm988, %v1535, 0
  %v1634 = vsel %vm988, %v1536, 0
  %v1637 = vsel %vm988, %v1537, 0
  %v1640 = vsel %vm1085, %v1542, 0
  %1642 = vmatprep.subr.bf16.mxu0 0
  %1643 = vmatpush1.bf16.msra.mxu0 0
  %1644 = vmatprep.subr.bf16.mxu0 0
  %1645 = vmatpush1.bf16.msra.mxu0 0
  %1646 = vmatprep.subr.bf16.mxu0 0
  %1647 = vmatpush1.bf16.msra.mxu0 0
  %1648 = vmatprep.subr.bf16.mxu0 0
  %1649 = vmatpush1.bf16.msra.mxu0 0
  %1650 = vmatprep.subr.bf16.mxu0 0
  %1651 = vmatpush1.bf16.msra.mxu0 0
  %1652 = vmatprep.subr.bf16.mxu0 0
  %1653 = vmatpush1.bf16.msra.mxu0 0
  %1654 = vmatprep.subr.bf16.mxu0 0
  %1655 = vmatpush1.bf16.msra.mxu0 0
  %1656 = vmatprep.subr.bf16.mxu0 0
  %1657 = vmatpush1.bf16.msra.mxu0 %v1640
  %1658 = vmatprep.subr.bf16.mxu0 0
  %1659 = vmatpush2.bf16.msra.mxu0 0
  %1660 = vmatprep.subr.bf16.mxu0 0
  %1661 = vmatpush2.bf16.msra.mxu0 0
  %1662 = vmatprep.subr.bf16.mxu0 0
  %1663 = vmatpush2.bf16.msra.mxu0 0
  %1664 = vmatprep.subr.bf16.mxu0 0
  %1665 = vmatpush2.bf16.msra.mxu0 0
  %1666 = vmatprep.subr.bf16.mxu0 0
  %1667 = vmatpush2.bf16.msra.mxu0 0
  %1668 = vmatprep.subr.bf16.mxu0 0
  %1669 = vmatpush2.bf16.msra.mxu0 0
  %1670 = vmatprep.subr.bf16.mxu0 0
  %1671 = vmatpush2.bf16.msra.mxu0 0
  %1672 = vmatprep.subr.bf16.mxu0 0
  %1673 = vmatpush2.bf16.msra.mxu0 0
  %1674 = vmatprep.mubr.bf16.mxu0 0
  %1675 = vmatmul.mubr.bf16.gmra.mxu0 %v1544
  %v1676 = vpop.f32.mrf.mxu0
  %v1677 = vadd.f32 %v1124, %v1676
  %v1678 = vpop.f32.mrf.mxu0
  %v1679 = vpop.f32.mrf.mxu0
  %v1680 = vadd.f32 %v1127, %v1679
  %v1681 = vpop.f32.mrf.mxu0
  %1682 = vmatprep.mubr.bf16.mxu0 0
  %1683 = vmatmul.mubr.bf16.gmra.mxu0 %v1547
  %v1684 = vpop.f32.mrf.mxu0
  %v1685 = vadd.f32 %v1132, %v1684
  %v1686 = vpop.f32.mrf.mxu0
  %v1687 = vpop.f32.mrf.mxu0
  %v1688 = vadd.f32 %v1135, %v1687
  %v1689 = vpop.f32.mrf.mxu0
  %1690 = vmatprep.mubr.bf16.mxu0 0
  %1691 = vmatmul.mubr.bf16.gmra.mxu0 %v1550
  %v1692 = vpop.f32.mrf.mxu0
  %v1693 = vadd.f32 %v1140, %v1692
  %v1694 = vpop.f32.mrf.mxu0
  %v1695 = vpop.f32.mrf.mxu0
  %v1696 = vadd.f32 %v1143, %v1695
  %v1697 = vpop.f32.mrf.mxu0
  %1698 = vmatprep.mubr.bf16.mxu0 0
  %1699 = vmatmul.mubr.bf16.gmra.mxu0 %v1553
  %v1700 = vpop.f32.mrf.mxu0
  %v1701 = vadd.f32 %v1148, %v1700
  %v1702 = vpop.f32.mrf.mxu0
  %v1703 = vpop.f32.mrf.mxu0
  %v1704 = vadd.f32 %v1151, %v1703
  %v1705 = vpop.f32.mrf.mxu0
  %1706 = vmatprep.mubr.bf16.mxu0 0
  %1707 = vmatmul.mubr.bf16.gmra.mxu0 %v1556
  %v1708 = vpop.f32.mrf.mxu0
  %v1709 = vadd.f32 %v1156, %v1708
  %v1710 = vpop.f32.mrf.mxu0
  %v1711 = vpop.f32.mrf.mxu0
  %v1712 = vadd.f32 %v1159, %v1711
  %v1713 = vpop.f32.mrf.mxu0
  %1714 = vmatprep.mubr.bf16.mxu0 0
  %1715 = vmatmul.mubr.bf16.gmra.mxu0 %v1559
  %v1716 = vpop.f32.mrf.mxu0
  %v1717 = vadd.f32 %v1164, %v1716
  %v1718 = vpop.f32.mrf.mxu0
  %v1719 = vpop.f32.mrf.mxu0
  %v1720 = vadd.f32 %v1167, %v1719
  %v1721 = vpop.f32.mrf.mxu0
  %1722 = vmatprep.mubr.bf16.mxu0 0
  %1723 = vmatmul.mubr.bf16.gmra.mxu0 %v1562
  %v1724 = vpop.f32.mrf.mxu0
  %v1725 = vadd.f32 %v1172, %v1724
  %v1726 = vpop.f32.mrf.mxu0
  %v1727 = vpop.f32.mrf.mxu0
  %v1728 = vadd.f32 %v1175, %v1727
  %v1729 = vpop.f32.mrf.mxu0
  %1730 = vmatprep.mubr.bf16.mxu0 0
  %1731 = vmatmul.mubr.bf16.gmra.mxu0 %v1565
  %v1732 = vpop.f32.mrf.mxu0
  %v1733 = vadd.f32 %v1180, %v1732
  %v1734 = vpop.f32.mrf.mxu0
  %v1735 = vpop.f32.mrf.mxu0
  %v1736 = vadd.f32 %v1183, %v1735
  %v1737 = vpop.f32.mrf.mxu0
  %1738 = vmatprep.mubr.bf16.mxu0 0
  %1739 = vmatmul.mubr.bf16.gmra.mxu0 %v1568
  %v1740 = vpop.f32.mrf.mxu0
  %v1741 = vadd.f32 %v1188, %v1740
  %v1742 = vpop.f32.mrf.mxu0
  %v1743 = vpop.f32.mrf.mxu0
  %v1744 = vadd.f32 %v1191, %v1743
  %v1745 = vpop.f32.mrf.mxu0
  %1746 = vmatprep.mubr.bf16.mxu0 0
  %1747 = vmatmul.mubr.bf16.gmra.mxu0 %v1571
  %v1748 = vpop.f32.mrf.mxu0
  %v1749 = vadd.f32 %v1196, %v1748
  %v1750 = vpop.f32.mrf.mxu0
  %v1751 = vpop.f32.mrf.mxu0
  %v1752 = vadd.f32 %v1199, %v1751
  %v1753 = vpop.f32.mrf.mxu0
  %1754 = vmatprep.mubr.bf16.mxu0 0
  %1755 = vmatmul.mubr.bf16.gmra.mxu0 %v1574
  %v1756 = vpop.f32.mrf.mxu0
  %v1757 = vadd.f32 %v1204, %v1756
  %v1758 = vpop.f32.mrf.mxu0
  %v1759 = vpop.f32.mrf.mxu0
  %v1760 = vadd.f32 %v1207, %v1759
  %v1761 = vpop.f32.mrf.mxu0
  %1762 = vmatprep.mubr.bf16.mxu0 0
  %1763 = vmatmul.mubr.bf16.gmra.mxu0 %v1577
  %v1764 = vpop.f32.mrf.mxu0
  %v1765 = vadd.f32 %v1212, %v1764
  %v1766 = vpop.f32.mrf.mxu0
  %v1767 = vpop.f32.mrf.mxu0
  %v1768 = vadd.f32 %v1215, %v1767
  %v1769 = vpop.f32.mrf.mxu0
  %1770 = vmatprep.mubr.bf16.mxu0 0
  %1771 = vmatmul.mubr.bf16.gmra.mxu0 %v1580
  %v1772 = vpop.f32.mrf.mxu0
  %v1773 = vadd.f32 %v1220, %v1772
  %v1774 = vpop.f32.mrf.mxu0
  %v1775 = vpop.f32.mrf.mxu0
  %v1776 = vadd.f32 %v1223, %v1775
  %v1777 = vpop.f32.mrf.mxu0
  %1778 = vmatprep.mubr.bf16.mxu0 0
  %1779 = vmatmul.mubr.bf16.gmra.mxu0 %v1583
  %v1780 = vpop.f32.mrf.mxu0
  %v1781 = vadd.f32 %v1228, %v1780
  %v1782 = vpop.f32.mrf.mxu0
  %v1783 = vpop.f32.mrf.mxu0
  %v1784 = vadd.f32 %v1231, %v1783
  %v1785 = vpop.f32.mrf.mxu0
  %1786 = vmatprep.mubr.bf16.mxu0 0
  %1787 = vmatmul.mubr.bf16.gmra.mxu0 %v1586
  %v1788 = vpop.f32.mrf.mxu0
  %v1789 = vadd.f32 %v1236, %v1788
  %v1790 = vpop.f32.mrf.mxu0
  %v1791 = vpop.f32.mrf.mxu0
  %v1792 = vadd.f32 %v1239, %v1791
  %v1793 = vpop.f32.mrf.mxu0
  %1794 = vmatprep.mubr.bf16.mxu0 0
  %1795 = vmatmul.mubr.bf16.gmra.mxu0 %v1589
  %v1796 = vpop.f32.mrf.mxu0
  %v1797 = vadd.f32 %v1244, %v1796
  %v1798 = vpop.f32.mrf.mxu0
  %v1799 = vpop.f32.mrf.mxu0
  %v1800 = vadd.f32 %v1247, %v1799
  %v1801 = vpop.f32.mrf.mxu0
  %1802 = vmatprep.mubr.bf16.mxu0 0
  %1803 = vmatmul.mubr.bf16.gmra.mxu0 %v1592
  %v1804 = vpop.f32.mrf.mxu0
  %v1805 = vadd.f32 %v1252, %v1804
  %v1806 = vpop.f32.mrf.mxu0
  %v1807 = vpop.f32.mrf.mxu0
  %v1808 = vadd.f32 %v1255, %v1807
  %v1809 = vpop.f32.mrf.mxu0
  %1810 = vmatprep.mubr.bf16.mxu0 0
  %1811 = vmatmul.mubr.bf16.gmra.mxu0 %v1595
  %v1812 = vpop.f32.mrf.mxu0
  %v1813 = vadd.f32 %v1260, %v1812
  %v1814 = vpop.f32.mrf.mxu0
  %v1815 = vpop.f32.mrf.mxu0
  %v1816 = vadd.f32 %v1263, %v1815
  %v1817 = vpop.f32.mrf.mxu0
  %1818 = vmatprep.mubr.bf16.mxu0 0
  %1819 = vmatmul.mubr.bf16.gmra.mxu0 %v1598
  %v1820 = vpop.f32.mrf.mxu0
  %v1821 = vadd.f32 %v1268, %v1820
  %v1822 = vpop.f32.mrf.mxu0
  %v1823 = vpop.f32.mrf.mxu0
  %v1824 = vadd.f32 %v1271, %v1823
  %v1825 = vpop.f32.mrf.mxu0
  %1826 = vmatprep.mubr.bf16.mxu0 0
  %1827 = vmatmul.mubr.bf16.gmra.mxu0 %v1601
  %v1828 = vpop.f32.mrf.mxu0
  %v1829 = vadd.f32 %v1276, %v1828
  %v1830 = vpop.f32.mrf.mxu0
  %v1831 = vpop.f32.mrf.mxu0
  %v1832 = vadd.f32 %v1279, %v1831
  %v1833 = vpop.f32.mrf.mxu0
  %1834 = vmatprep.mubr.bf16.mxu0 0
  %1835 = vmatmul.mubr.bf16.gmra.mxu0 %v1604
  %v1836 = vpop.f32.mrf.mxu0
  %v1837 = vadd.f32 %v1284, %v1836
  %v1838 = vpop.f32.mrf.mxu0
  %v1839 = vpop.f32.mrf.mxu0
  %v1840 = vadd.f32 %v1287, %v1839
  %v1841 = vpop.f32.mrf.mxu0
  %1842 = vmatprep.mubr.bf16.mxu0 0
  %1843 = vmatmul.mubr.bf16.gmra.mxu0 %v1607
  %v1844 = vpop.f32.mrf.mxu0
  %v1845 = vadd.f32 %v1292, %v1844
  %v1846 = vpop.f32.mrf.mxu0
  %v1847 = vpop.f32.mrf.mxu0
  %v1848 = vadd.f32 %v1295, %v1847
  %v1849 = vpop.f32.mrf.mxu0
  %1850 = vmatprep.mubr.bf16.mxu0 0
  %1851 = vmatmul.mubr.bf16.gmra.mxu0 %v1610
  %v1852 = vpop.f32.mrf.mxu0
  %v1853 = vadd.f32 %v1300, %v1852
  %v1854 = vpop.f32.mrf.mxu0
  %v1855 = vpop.f32.mrf.mxu0
  %v1856 = vadd.f32 %v1303, %v1855
  %v1857 = vpop.f32.mrf.mxu0
  %1858 = vmatprep.mubr.bf16.mxu0 0
  %1859 = vmatmul.mubr.bf16.gmra.mxu0 %v1613
  %v1860 = vpop.f32.mrf.mxu0
  %v1861 = vadd.f32 %v1308, %v1860
  %v1862 = vpop.f32.mrf.mxu0
  %v1863 = vpop.f32.mrf.mxu0
  %v1864 = vadd.f32 %v1311, %v1863
  %v1865 = vpop.f32.mrf.mxu0
  %1866 = vmatprep.mubr.bf16.mxu0 0
  %1867 = vmatmul.mubr.bf16.gmra.mxu0 %v1616
  %v1868 = vpop.f32.mrf.mxu0
  %v1869 = vadd.f32 %v1316, %v1868
  %v1870 = vpop.f32.mrf.mxu0
  %v1871 = vpop.f32.mrf.mxu0
  %v1872 = vadd.f32 %v1319, %v1871
  %v1873 = vpop.f32.mrf.mxu0
  %1874 = vmatprep.mubr.bf16.mxu0 0
  %1875 = vmatmul.mubr.bf16.gmra.mxu0 %v1619
  %v1876 = vpop.f32.mrf.mxu0
  %v1877 = vadd.f32 %v1324, %v1876
  %v1878 = vpop.f32.mrf.mxu0
  %v1879 = vpop.f32.mrf.mxu0
  %v1880 = vadd.f32 %v1327, %v1879
  %v1881 = vpop.f32.mrf.mxu0
  %1882 = vmatprep.mubr.bf16.mxu0 0
  %1883 = vmatmul.mubr.bf16.gmra.mxu0 %v1622
  %v1884 = vpop.f32.mrf.mxu0
  %v1885 = vadd.f32 %v1332, %v1884
  %v1886 = vpop.f32.mrf.mxu0
  %v1887 = vpop.f32.mrf.mxu0
  %v1888 = vadd.f32 %v1335, %v1887
  %v1889 = vpop.f32.mrf.mxu0
  %1890 = vmatprep.mubr.bf16.mxu0 0
  %1891 = vmatmul.mubr.bf16.gmra.mxu0 %v1625
  %v1892 = vpop.f32.mrf.mxu0
  %v1893 = vadd.f32 %v1340, %v1892
  %v1894 = vpop.f32.mrf.mxu0
  %v1895 = vpop.f32.mrf.mxu0
  %v1896 = vadd.f32 %v1343, %v1895
  %v1897 = vpop.f32.mrf.mxu0
  %1898 = vmatprep.mubr.bf16.mxu0 0
  %1899 = vmatmul.mubr.bf16.gmra.mxu0 %v1628
  %v1900 = vpop.f32.mrf.mxu0
  %v1901 = vadd.f32 %v1348, %v1900
  %v1902 = vpop.f32.mrf.mxu0
  %v1903 = vpop.f32.mrf.mxu0
  %v1904 = vadd.f32 %v1351, %v1903
  %v1905 = vpop.f32.mrf.mxu0
  %1906 = vmatprep.mubr.bf16.mxu0 0
  %1907 = vmatmul.mubr.bf16.gmra.mxu0 %v1631
  %v1908 = vpop.f32.mrf.mxu0
  %v1909 = vadd.f32 %v1356, %v1908
  %v1910 = vpop.f32.mrf.mxu0
  %v1911 = vpop.f32.mrf.mxu0
  %v1912 = vadd.f32 %v1359, %v1911
  %v1913 = vpop.f32.mrf.mxu0
  %1914 = vmatprep.mubr.bf16.mxu0 0
  %1915 = vmatmul.mubr.bf16.gmra.mxu0 %v1634
  %v1916 = vpop.f32.mrf.mxu0
  %v1917 = vadd.f32 %v1364, %v1916
  %v1918 = vpop.f32.mrf.mxu0
  %v1919 = vpop.f32.mrf.mxu0
  %v1920 = vadd.f32 %v1367, %v1919
  %v1921 = vpop.f32.mrf.mxu0
  %1922 = vmatprep.mubr.bf16.mxu0 0
  %1923 = vmatmul.mubr.bf16.gmra.mxu0 %v1637
  %v1924 = vpop.f32.mrf.mxu0
  %v1925 = vadd.f32 %v1372, %v1924
  %v1926 = vpop.f32.mrf.mxu0
  %v1927 = vpop.f32.mrf.mxu0
  %v1928 = vadd.f32 %v1375, %v1927
  %v1929 = vpop.f32.mrf.mxu0
  %1930 = vdwg.mxu0
  %v1931 = vld [vmem:[%s0] sm:$0xe]
  %v1932 = vld [vmem:[%s0 + $0xc] sm:$0xe]
  %v1933 = vld [vmem:[%s0 + $0x18] sm:$0xe]
  %v1934 = vld [vmem:[%s0 + $0x24] sm:$0xe]
  %v1935 = vld [vmem:[%s0 + $0x30] sm:$0xe]
  %v1936 = vld [vmem:[%s0 + $0x3c] sm:$0xe]
  %v1937 = vld [vmem:[%s0 + $0x48] sm:$0xe]
  %v1938 = vld [vmem:[%s0 + $0x54] sm:$0xe]
  %v1939 = vld [vmem:[%s0 + $0x60] sm:$0xe]
  %v1940 = vld [vmem:[%s0 + $0x6c] sm:$0xe]
  %v1941 = vld [vmem:[%s0 + $0x78] sm:$0xe]
  %v1942 = vld [vmem:[%s0 + $0x84] sm:$0xe]
  %v1943 = vld [vmem:[%s0 + $0x90] sm:$0xe]
  %v1944 = vld [vmem:[%s0 + $0x9c] sm:$0xe]
  %v1945 = vld [vmem:[%s0 + $0xa8] sm:$0xe]
  %v1946 = vld [vmem:[%s0 + $0xb4] sm:$0xe]
  %v1947 = vld [vmem:[%s0 + $0xc0] sm:$0xe]
  %v1948 = vld [vmem:[%s0 + $0xcc] sm:$0xe]
  %v1949 = vld [vmem:[%s0 + $0xd8] sm:$0xe]
  %v1950 = vld [vmem:[%s0 + $0xe4] sm:$0xe]
  %v1951 = vld [vmem:[%s0 + $0xf0] sm:$0xe]
  %v1952 = vld [vmem:[%s0 + $0xfc] sm:$0xe]
  %v1953 = vld [vmem:[%s0 + $0x108] sm:$0xe]
  %v1954 = vld [vmem:[%s0 + $0x114] sm:$0xe]
  %v1955 = vld [vmem:[%s0 + $0x120] sm:$0xe]
  %v1956 = vld [vmem:[%s0 + $0x12c] sm:$0xe]
  %v1957 = vld [vmem:[%s0 + $0x138] sm:$0xe]
  %v1958 = vld [vmem:[%s0 + $0x144] sm:$0xe]
  %v1959 = vld [vmem:[%s0 + $0x150] sm:$0xe]
  %v1960 = vld [vmem:[%s0 + $0x15c] sm:$0xe]
  %v1961 = vld [vmem:[%s0 + $0x168] sm:$0xe]
  %v1962 = vld [vmem:[%s0 + $0x174] sm:$0xe]
  %vm2027 = vcmask 1042432
  %vm2028 = vcmask 1046532
  %vm2029 = vmor %vm2027, %vm2028
  %v2030 = vrot.slane %v1931, 5
  %v2031 = vrot.slane %v2030, 4
  %v2032 = vrot.slane %v16, 5
  %v2033 = vsel %vm2029, %v2031, %v2032
  %v2034 = vrot.slane %v2032, 4
  %v2035 = vrot.slane %v81, 5
  %v2036 = vsel %vm2029, %v2034, %v2035
  %v2037 = vrot.slane %v1932, 5
  %v2038 = vrot.slane %v2037, 4
  %v2039 = vrot.slane %v18, 5
  %v2040 = vsel %vm2029, %v2038, %v2039
  %v2041 = vrot.slane %v2039, 4
  %v2042 = vrot.slane %v82, 5
  %v2043 = vsel %vm2029, %v2041, %v2042
  %v2044 = vrot.slane %v1933, 5
  %v2045 = vrot.slane %v2044, 4
  %v2046 = vrot.slane %v20, 5
  %v2047 = vsel %vm2029, %v2045, %v2046
  %v2048 = vrot.slane %v2046, 4
  %v2049 = vrot.slane %v83, 5
  %v2050 = vsel %vm2029, %v2048, %v2049
  %v2051 = vrot.slane %v1934, 5
  %v2052 = vrot.slane %v2051, 4
  %v2053 = vrot.slane %v22, 5
  %v2054 = vsel %vm2029, %v2052, %v2053
  %v2055 = vrot.slane %v2053, 4
  %v2056 = vrot.slane %v84, 5
  %v2057 = vsel %vm2029, %v2055, %v2056
  %v2058 = vrot.slane %v1935, 5
  %v2059 = vrot.slane %v2058, 4
  %v2060 = vrot.slane %v24, 5
  %v2061 = vsel %vm2029, %v2059, %v2060
  %v2062 = vrot.slane %v2060, 4
  %v2063 = vrot.slane %v85, 5
  %v2064 = vsel %vm2029, %v2062, %v2063
  %v2065 = vrot.slane %v1936, 5
  %v2066 = vrot.slane %v2065, 4
  %v2067 = vrot.slane %v26, 5
  %v2068 = vsel %vm2029, %v2066, %v2067
  %v2069 = vrot.slane %v2067, 4
  %v2070 = vrot.slane %v86, 5
  %v2071 = vsel %vm2029, %v2069, %v2070
  %v2072 = vrot.slane %v1937, 5
  %v2073 = vrot.slane %v2072, 4
  %v2074 = vrot.slane %v28, 5
  %v2075 = vsel %vm2029, %v2073, %v2074
  %v2076 = vrot.slane %v2074, 4
  %v2077 = vrot.slane %v87, 5
  %v2078 = vsel %vm2029, %v2076, %v2077
  %v2079 = vrot.slane %v1938, 5
  %v2080 = vrot.slane %v2079, 4
  %v2081 = vrot.slane %v30, 5
  %v2082 = vsel %vm2029, %v2080, %v2081
  %v2083 = vrot.slane %v2081, 4
  %v2084 = vrot.slane %v88, 5
  %v2085 = vsel %vm2029, %v2083, %v2084
  %v2086 = vrot.slane %v1939, 5
  %v2087 = vrot.slane %v2086, 4
  %v2088 = vrot.slane %v32, 5
  %v2089 = vsel %vm2029, %v2087, %v2088
  %v2090 = vrot.slane %v2088, 4
  %v2091 = vrot.slane %v89, 5
  %v2092 = vsel %vm2029, %v2090, %v2091
  %v2093 = vrot.slane %v1940, 5
  %v2094 = vrot.slane %v2093, 4
  %v2095 = vrot.slane %v34, 5
  %v2096 = vsel %vm2029, %v2094, %v2095
  %v2097 = vrot.slane %v2095, 4
  %v2098 = vrot.slane %v90, 5
  %v2099 = vsel %vm2029, %v2097, %v2098
  %v2100 = vrot.slane %v1941, 5
  %v2101 = vrot.slane %v2100, 4
  %v2102 = vrot.slane %v36, 5
  %v2103 = vsel %vm2029, %v2101, %v2102
  %v2104 = vrot.slane %v2102, 4
  %v2105 = vrot.slane %v91, 5
  %v2106 = vsel %vm2029, %v2104, %v2105
  %v2107 = vrot.slane %v1942, 5
  %v2108 = vrot.slane %v2107, 4
  %v2109 = vrot.slane %v38, 5
  %v2110 = vsel %vm2029, %v2108, %v2109
  %v2111 = vrot.slane %v2109, 4
  %v2112 = vrot.slane %v92, 5
  %v2113 = vsel %vm2029, %v2111, %v2112
  %v2114 = vrot.slane %v1943, 5
  %v2115 = vrot.slane %v2114, 4
  %v2116 = vrot.slane %v40, 5
  %v2117 = vsel %vm2029, %v2115, %v2116
  %v2118 = vrot.slane %v2116, 4
  %v2119 = vrot.slane %v93, 5
  %v2120 = vsel %vm2029, %v2118, %v2119
  %v2121 = vrot.slane %v1944, 5
  %v2122 = vrot.slane %v2121, 4
  %v2123 = vrot.slane %v42, 5
  %v2124 = vsel %vm2029, %v2122, %v2123
  %v2125 = vrot.slane %v2123, 4
  %v2126 = vrot.slane %v94, 5
  %v2127 = vsel %vm2029, %v2125, %v2126
  %v2128 = vrot.slane %v1945, 5
  %v2129 = vrot.slane %v2128, 4
  %v2130 = vrot.slane %v44, 5
  %v2131 = vsel %vm2029, %v2129, %v2130
  %v2132 = vrot.slane %v2130, 4
  %v2133 = vrot.slane %v95, 5
  %v2134 = vsel %vm2029, %v2132, %v2133
  %v2135 = vrot.slane %v1946, 5
  %v2136 = vrot.slane %v2135, 4
  %v2137 = vrot.slane %v46, 5
  %v2138 = vsel %vm2029, %v2136, %v2137
  %v2139 = vrot.slane %v2137, 4
  %v2140 = vrot.slane %v96, 5
  %v2141 = vsel %vm2029, %v2139, %v2140
  %v2142 = vrot.slane %v1947, 5
  %v2143 = vrot.slane %v2142, 4
  %v2144 = vrot.slane %v48, 5
  %v2145 = vsel %vm2029, %v2143, %v2144
  %v2146 = vrot.slane %v2144, 4
  %v2147 = vrot.slane %v97, 5
  %v2148 = vsel %vm2029, %v2146, %v2147
  %v2149 = vrot.slane %v1948, 5
  %v2150 = vrot.slane %v2149, 4
  %v2151 = vrot.slane %v50, 5
  %v2152 = vsel %vm2029, %v2150, %v2151
  %v2153 = vrot.slane %v2151, 4
  %v2154 = vrot.slane %v98, 5
  %v2155 = vsel %vm2029, %v2153, %v2154
  %v2156 = vrot.slane %v1949, 5
  %v2157 = vrot.slane %v2156, 4
  %v2158 = vrot.slane %v52, 5
  %v2159 = vsel %vm2029, %v2157, %v2158
  %v2160 = vrot.slane %v2158, 4
  %v2161 = vrot.slane %v99, 5
  %v2162 = vsel %vm2029, %v2160, %v2161
  %v2163 = vrot.slane %v1950, 5
  %v2164 = vrot.slane %v2163, 4
  %v2165 = vrot.slane %v54, 5
  %v2166 = vsel %vm2029, %v2164, %v2165
  %v2167 = vrot.slane %v2165, 4
  %v2168 = vrot.slane %v100, 5
  %v2169 = vsel %vm2029, %v2167, %v2168
  %v2170 = vrot.slane %v1951, 5
  %v2171 = vrot.slane %v2170, 4
  %v2172 = vrot.slane %v56, 5
  %v2173 = vsel %vm2029, %v2171, %v2172
  %v2174 = vrot.slane %v2172, 4
  %v2175 = vrot.slane %v101, 5
  %v2176 = vsel %vm2029, %v2174, %v2175
  %v2177 = vrot.slane %v1952, 5
  %v2178 = vrot.slane %v2177, 4
  %v2179 = vrot.slane %v58, 5
  %v2180 = vsel %vm2029, %v2178, %v2179
  %v2181 = vrot.slane %v2179, 4
  %v2182 = vrot.slane %v102, 5
  %v2183 = vsel %vm2029, %v2181, %v2182
  %v2184 = vrot.slane %v1953, 5
  %v2185 = vrot.slane %v2184, 4
  %v2186 = vrot.slane %v60, 5
  %v2187 = vsel %vm2029, %v2185, %v2186
  %v2188 = vrot.slane %v2186, 4
  %v2189 = vrot.slane %v103, 5
  %v2190 = vsel %vm2029, %v2188, %v2189
  %v2191 = vrot.slane %v1954, 5
  %v2192 = vrot.slane %v2191, 4
  %v2193 = vrot.slane %v62, 5
  %v2194 = vsel %vm2029, %v2192, %v2193
  %v2195 = vrot.slane %v2193, 4
  %v2196 = vrot.slane %v104, 5
  %v2197 = vsel %vm2029, %v2195, %v2196
  %v2198 = vrot.slane %v1955, 5
  %v2199 = vrot.slane %v2198, 4
  %v2200 = vrot.slane %v64, 5
  %v2201 = vsel %vm2029, %v2199, %v2200
  %v2202 = vrot.slane %v2200, 4
  %v2203 = vrot.slane %v105, 5
  %v2204 = vsel %vm2029, %v2202, %v2203
  %v2205 = vrot.slane %v1956, 5
  %v2206 = vrot.slane %v2205, 4
  %v2207 = vrot.slane %v66, 5
  %v2208 = vsel %vm2029, %v2206, %v2207
  %v2209 = vrot.slane %v2207, 4
  %v2210 = vrot.slane %v106, 5
  %v2211 = vsel %vm2029, %v2209, %v2210
  %v2212 = vrot.slane %v1957, 5
  %v2213 = vrot.slane %v2212, 4
  %v2214 = vrot.slane %v68, 5
  %v2215 = vsel %vm2029, %v2213, %v2214
  %v2216 = vrot.slane %v2214, 4
  %v2217 = vrot.slane %v107, 5
  %v2218 = vsel %vm2029, %v2216, %v2217
  %v2219 = vrot.slane %v1958, 5
  %v2220 = vrot.slane %v2219, 4
  %v2221 = vrot.slane %v70, 5
  %v2222 = vsel %vm2029, %v2220, %v2221
  %v2223 = vrot.slane %v2221, 4
  %v2224 = vrot.slane %v108, 5
  %v2225 = vsel %vm2029, %v2223, %v2224
  %v2226 = vrot.slane %v1959, 5
  %v2227 = vrot.slane %v2226, 4
  %v2228 = vrot.slane %v72, 5
  %v2229 = vsel %vm2029, %v2227, %v2228
  %v2230 = vrot.slane %v2228, 4
  %v2231 = vrot.slane %v109, 5
  %v2232 = vsel %vm2029, %v2230, %v2231
  %v2233 = vrot.slane %v1960, 5
  %v2234 = vrot.slane %v2233, 4
  %v2235 = vrot.slane %v74, 5
  %v2236 = vsel %vm2029, %v2234, %v2235
  %v2237 = vrot.slane %v2235, 4
  %v2238 = vrot.slane %v110, 5
  %v2239 = vsel %vm2029, %v2237, %v2238
  %v2240 = vrot.slane %v1961, 5
  %v2241 = vrot.slane %v2240, 4
  %v2242 = vrot.slane %v76, 5
  %v2243 = vsel %vm2029, %v2241, %v2242
  %v2244 = vrot.slane %v2242, 4
  %v2245 = vrot.slane %v111, 5
  %v2246 = vsel %vm2029, %v2244, %v2245
  %v2247 = vrot.slane %v1962, 5
  %v2248 = vrot.slane %v2247, 4
  %v2249 = vrot.slane %v78, 5
  %v2250 = vsel %vm2029, %v2248, %v2249
  %v2251 = vrot.slane %v2249, 4
  %v2252 = vrot.slane %v112, 5
  %v2253 = vsel %vm2029, %v2251, %v2252
  %s2254 = scalar_lea.vmem %s1, 16
  %v2255 = vld [vmem:[%s2254] sm:$0xf]
  %v2256 = vld [vmem:[%s2254 + $0x4] sm:$0x3]
  %v2257 = vunpack.c.l.b16 %v2033
  %v2258 = vunpack.c.l.b16 %v2036
  %v2259 = vunpack.c.l.b16 %v2040
  %v2260 = vunpack.c.l.b16 %v2043
  %v2261 = vunpack.c.l.b16 %v2047
  %v2262 = vunpack.c.l.b16 %v2050
  %v2263 = vunpack.c.l.b16 %v2054
  %v2264 = vunpack.c.l.b16 %v2057
  %v2265 = vunpack.c.l.b16 %v2061
  %v2266 = vunpack.c.l.b16 %v2064
  %v2267 = vunpack.c.l.b16 %v2068
  %v2268 = vunpack.c.l.b16 %v2071
  %v2269 = vunpack.c.l.b16 %v2075
  %v2270 = vunpack.c.l.b16 %v2078
  %v2271 = vunpack.c.l.b16 %v2082
  %v2272 = vunpack.c.l.b16 %v2085
  %v2273 = vunpack.c.l.b16 %v2089
  %v2274 = vunpack.c.l.b16 %v2092
  %v2275 = vunpack.c.l.b16 %v2096
  %v2276 = vunpack.c.l.b16 %v2099
  %v2277 = vunpack.c.l.b16 %v2103
  %v2278 = vunpack.c.l.b16 %v2106
  %v2279 = vunpack.c.l.b16 %v2110
  %v2280 = vunpack.c.l.b16 %v2113
  %v2281 = vunpack.c.l.b16 %v2117
  %v2282 = vunpack.c.l.b16 %v2120
  %v2283 = vunpack.c.l.b16 %v2124
  %v2284 = vunpack.c.l.b16 %v2127
  %v2285 = vunpack.c.l.b16 %v2131
  %v2286 = vunpack.c.l.b16 %v2134
  %v2287 = vunpack.c.l.b16 %v2138
  %v2288 = vunpack.c.l.b16 %v2141
  %v2289 = vunpack.c.l.b16 %v2145
  %v2290 = vunpack.c.l.b16 %v2148
  %v2291 = vunpack.c.l.b16 %v2152
  %v2292 = vunpack.c.l.b16 %v2155
  %v2293 = vunpack.c.l.b16 %v2159
  %v2294 = vunpack.c.l.b16 %v2162
  %v2295 = vunpack.c.l.b16 %v2166
  %v2296 = vunpack.c.l.b16 %v2169
  %v2297 = vunpack.c.l.b16 %v2173
  %v2298 = vunpack.c.l.b16 %v2176
  %v2299 = vunpack.c.l.b16 %v2180
  %v2300 = vunpack.c.l.b16 %v2183
  %v2301 = vunpack.c.l.b16 %v2187
  %v2302 = vunpack.c.l.b16 %v2190
  %v2303 = vunpack.c.l.b16 %v2194
  %v2304 = vunpack.c.l.b16 %v2197
  %v2305 = vunpack.c.l.b16 %v2201
  %v2306 = vunpack.c.l.b16 %v2204
  %v2307 = vunpack.c.l.b16 %v2208
  %v2308 = vunpack.c.l.b16 %v2211
  %v2309 = vunpack.c.l.b16 %v2215
  %v2310 = vunpack.c.l.b16 %v2218
  %v2311 = vunpack.c.l.b16 %v2222
  %v2312 = vunpack.c.l.b16 %v2225
  %v2313 = vunpack.c.l.b16 %v2229
  %v2314 = vunpack.c.l.b16 %v2232
  %v2315 = vunpack.c.l.b16 %v2236
  %v2316 = vunpack.c.l.b16 %v2239
  %v2317 = vunpack.c.l.b16 %v2243
  %v2318 = vunpack.c.l.b16 %v2246
  %v2319 = vunpack.c.l.b16 %v2250
  %v2320 = vunpack.c.l.b16 %v2253
  %v2321 = vpack.c.b16 %v2258, %v2257
  %v2322 = vpack.c.b16 %v2260, %v2259
  %v2323 = vpack.c.b16 %v2262, %v2261
  %v2324 = vpack.c.b16 %v2264, %v2263
  %v2325 = vpack.c.b16 %v2266, %v2265
  %v2326 = vpack.c.b16 %v2268, %v2267
  %v2327 = vpack.c.b16 %v2270, %v2269
  %v2328 = vpack.c.b16 %v2272, %v2271
  %v2329 = vpack.c.b16 %v2274, %v2273
  %v2330 = vpack.c.b16 %v2276, %v2275
  %v2331 = vpack.c.b16 %v2278, %v2277
  %v2332 = vpack.c.b16 %v2280, %v2279
  %v2333 = vpack.c.b16 %v2282, %v2281
  %v2334 = vpack.c.b16 %v2284, %v2283
  %v2335 = vpack.c.b16 %v2286, %v2285
  %v2336 = vpack.c.b16 %v2288, %v2287
  %v2337 = vpack.c.b16 %v2290, %v2289
  %v2338 = vpack.c.b16 %v2292, %v2291
  %v2339 = vpack.c.b16 %v2294, %v2293
  %v2340 = vpack.c.b16 %v2296, %v2295
  %v2341 = vpack.c.b16 %v2298, %v2297
  %v2342 = vpack.c.b16 %v2300, %v2299
  %v2343 = vpack.c.b16 %v2302, %v2301
  %v2344 = vpack.c.b16 %v2304, %v2303
  %v2345 = vpack.c.b16 %v2306, %v2305
  %v2346 = vpack.c.b16 %v2308, %v2307
  %v2347 = vpack.c.b16 %v2310, %v2309
  %v2348 = vpack.c.b16 %v2312, %v2311
  %v2349 = vpack.c.b16 %v2314, %v2313
  %v2350 = vpack.c.b16 %v2316, %v2315
  %v2351 = vpack.c.b16 %v2318, %v2317
  %v2352 = vpack.c.b16 %v2320, %v2319
  %v2355 = vunpack.c.l.b16 %v2255
  %v2356 = vunpack.c.l.b16 %v2256
  %v2357 = vpack.c.b16 %v2356, %v2355
  %v2359 = vsel %vm988, %v2321, 0
  %v2362 = vsel %vm988, %v2322, 0
  %v2365 = vsel %vm988, %v2323, 0
  %v2368 = vsel %vm988, %v2324, 0
  %v2371 = vsel %vm988, %v2325, 0
  %v2374 = vsel %vm988, %v2326, 0
  %v2377 = vsel %vm988, %v2327, 0
  %v2380 = vsel %vm988, %v2328, 0
  %v2383 = vsel %vm988, %v2329, 0
  %v2386 = vsel %vm988, %v2330, 0
  %v2389 = vsel %vm988, %v2331, 0
  %v2392 = vsel %vm988, %v2332, 0
  %v2395 = vsel %vm988, %v2333, 0
  %v2398 = vsel %vm988, %v2334, 0
  %v2401 = vsel %vm988, %v2335, 0
  %v2404 = vsel %vm988, %v2336, 0
  %v2407 = vsel %vm988, %v2337, 0
  %v2410 = vsel %vm988, %v2338, 0
  %v2413 = vsel %vm988, %v2339, 0
  %v2416 = vsel %vm988, %v2340, 0
  %v2419 = vsel %vm988, %v2341, 0
  %v2422 = vsel %vm988, %v2342, 0
  %v2425 = vsel %vm988, %v2343, 0
  %v2428 = vsel %vm988, %v2344, 0
  %v2431 = vsel %vm988, %v2345, 0
  %v2434 = vsel %vm988, %v2346, 0
  %v2437 = vsel %vm988, %v2347, 0
  %v2440 = vsel %vm988, %v2348, 0
  %v2443 = vsel %vm988, %v2349, 0
  %v2446 = vsel %vm988, %v2350, 0
  %v2449 = vsel %vm988, %v2351, 0
  %v2452 = vsel %vm988, %v2352, 0
  %v2455 = vsel %vm1085, %v2357, 0
  %2457 = vmatprep.subr.bf16.mxu0 0
  %2458 = vmatpush1.bf16.msra.mxu0 0
  %2459 = vmatprep.subr.bf16.mxu0 0
  %2460 = vmatpush1.bf16.msra.mxu0 0
  %2461 = vmatprep.subr.bf16.mxu0 0
  %2462 = vmatpush1.bf16.msra.mxu0 0
  %2463 = vmatprep.subr.bf16.mxu0 0
  %2464 = vmatpush1.bf16.msra.mxu0 0
  %2465 = vmatprep.subr.bf16.mxu0 0
  %2466 = vmatpush1.bf16.msra.mxu0 0
  %2467 = vmatprep.subr.bf16.mxu0 0
  %2468 = vmatpush1.bf16.msra.mxu0 0
  %2469 = vmatprep.subr.bf16.mxu0 0
  %2470 = vmatpush1.bf16.msra.mxu0 0
  %2471 = vmatprep.subr.bf16.mxu0 0
  %2472 = vmatpush1.bf16.msra.mxu0 %v2455
  %2473 = vmatprep.subr.bf16.mxu0 0
  %2474 = vmatpush2.bf16.msra.mxu0 0
  %2475 = vmatprep.subr.bf16.mxu0 0
  %2476 = vmatpush2.bf16.msra.mxu0 0
  %2477 = vmatprep.subr.bf16.mxu0 0
  %2478 = vmatpush2.bf16.msra.mxu0 0
  %2479 = vmatprep.subr.bf16.mxu0 0
  %2480 = vmatpush2.bf16.msra.mxu0 0
  %2481 = vmatprep.subr.bf16.mxu0 0
  %2482 = vmatpush2.bf16.msra.mxu0 0
  %2483 = vmatprep.subr.bf16.mxu0 0
  %2484 = vmatpush2.bf16.msra.mxu0 0
  %2485 = vmatprep.subr.bf16.mxu0 0
  %2486 = vmatpush2.bf16.msra.mxu0 0
  %2487 = vmatprep.subr.bf16.mxu0 0
  %2488 = vmatpush2.bf16.msra.mxu0 0
  %2489 = vmatprep.mubr.bf16.mxu0 0
  %2490 = vmatmul.mubr.bf16.gmra.mxu0 %v2359
  %v2491 = vpop.f32.mrf.mxu0
  %v2492 = vadd.f32 0.0, %v2491
  %v2493 = vpop.f32.mrf.mxu0
  %v2494 = vpop.f32.mrf.mxu0
  %v2495 = vadd.f32 0.0, %v2494
  %v2496 = vpop.f32.mrf.mxu0
  %2497 = vmatprep.mubr.bf16.mxu0 0
  %2498 = vmatmul.mubr.bf16.gmra.mxu0 %v2362
  %v2499 = vpop.f32.mrf.mxu0
  %v2500 = vadd.f32 0.0, %v2499
  %v2501 = vpop.f32.mrf.mxu0
  %v2502 = vpop.f32.mrf.mxu0
  %v2503 = vadd.f32 0.0, %v2502
  %v2504 = vpop.f32.mrf.mxu0
  %2505 = vmatprep.mubr.bf16.mxu0 0
  %2506 = vmatmul.mubr.bf16.gmra.mxu0 %v2365
  %v2507 = vpop.f32.mrf.mxu0
  %v2508 = vadd.f32 0.0, %v2507
  %v2509 = vpop.f32.mrf.mxu0
  %v2510 = vpop.f32.mrf.mxu0
  %v2511 = vadd.f32 0.0, %v2510
  %v2512 = vpop.f32.mrf.mxu0
  %2513 = vmatprep.mubr.bf16.mxu0 0
  %2514 = vmatmul.mubr.bf16.gmra.mxu0 %v2368
  %v2515 = vpop.f32.mrf.mxu0
  %v2516 = vadd.f32 0.0, %v2515
  %v2517 = vpop.f32.mrf.mxu0
  %v2518 = vpop.f32.mrf.mxu0
  %v2519 = vadd.f32 0.0, %v2518
  %v2520 = vpop.f32.mrf.mxu0
  %2521 = vmatprep.mubr.bf16.mxu0 0
  %2522 = vmatmul.mubr.bf16.gmra.mxu0 %v2371
  %v2523 = vpop.f32.mrf.mxu0
  %v2524 = vadd.f32 0.0, %v2523
  %v2525 = vpop.f32.mrf.mxu0
  %v2526 = vpop.f32.mrf.mxu0
  %v2527 = vadd.f32 0.0, %v2526
  %v2528 = vpop.f32.mrf.mxu0
  %2529 = vmatprep.mubr.bf16.mxu0 0
  %2530 = vmatmul.mubr.bf16.gmra.mxu0 %v2374
  %v2531 = vpop.f32.mrf.mxu0
  %v2532 = vadd.f32 0.0, %v2531
  %v2533 = vpop.f32.mrf.mxu0
  %v2534 = vpop.f32.mrf.mxu0
  %v2535 = vadd.f32 0.0, %v2534
  %v2536 = vpop.f32.mrf.mxu0
  %2537 = vmatprep.mubr.bf16.mxu0 0
  %2538 = vmatmul.mubr.bf16.gmra.mxu0 %v2377
  %v2539 = vpop.f32.mrf.mxu0
  %v2540 = vadd.f32 0.0, %v2539
  %v2541 = vpop.f32.mrf.mxu0
  %v2542 = vpop.f32.mrf.mxu0
  %v2543 = vadd.f32 0.0, %v2542
  %v2544 = vpop.f32.mrf.mxu0
  %2545 = vmatprep.mubr.bf16.mxu0 0
  %2546 = vmatmul.mubr.bf16.gmra.mxu0 %v2380
  %v2547 = vpop.f32.mrf.mxu0
  %v2548 = vadd.f32 0.0, %v2547
  %v2549 = vpop.f32.mrf.mxu0
  %v2550 = vpop.f32.mrf.mxu0
  %v2551 = vadd.f32 0.0, %v2550
  %v2552 = vpop.f32.mrf.mxu0
  %2553 = vmatprep.mubr.bf16.mxu0 0
  %2554 = vmatmul.mubr.bf16.gmra.mxu0 %v2383
  %v2555 = vpop.f32.mrf.mxu0
  %v2556 = vadd.f32 0.0, %v2555
  %v2557 = vpop.f32.mrf.mxu0
  %v2558 = vpop.f32.mrf.mxu0
  %v2559 = vadd.f32 0.0, %v2558
  %v2560 = vpop.f32.mrf.mxu0
  %2561 = vmatprep.mubr.bf16.mxu0 0
  %2562 = vmatmul.mubr.bf16.gmra.mxu0 %v2386
  %v2563 = vpop.f32.mrf.mxu0
  %v2564 = vadd.f32 0.0, %v2563
  %v2565 = vpop.f32.mrf.mxu0
  %v2566 = vpop.f32.mrf.mxu0
  %v2567 = vadd.f32 0.0, %v2566
  %v2568 = vpop.f32.mrf.mxu0
  %2569 = vmatprep.mubr.bf16.mxu0 0
  %2570 = vmatmul.mubr.bf16.gmra.mxu0 %v2389
  %v2571 = vpop.f32.mrf.mxu0
  %v2572 = vadd.f32 0.0, %v2571
  %v2573 = vpop.f32.mrf.mxu0
  %v2574 = vpop.f32.mrf.mxu0
  %v2575 = vadd.f32 0.0, %v2574
  %v2576 = vpop.f32.mrf.mxu0
  %2577 = vmatprep.mubr.bf16.mxu0 0
  %2578 = vmatmul.mubr.bf16.gmra.mxu0 %v2392
  %v2579 = vpop.f32.mrf.mxu0
  %v2580 = vadd.f32 0.0, %v2579
  %v2581 = vpop.f32.mrf.mxu0
  %v2582 = vpop.f32.mrf.mxu0
  %v2583 = vadd.f32 0.0, %v2582
  %v2584 = vpop.f32.mrf.mxu0
  %2585 = vmatprep.mubr.bf16.mxu0 0
  %2586 = vmatmul.mubr.bf16.gmra.mxu0 %v2395
  %v2587 = vpop.f32.mrf.mxu0
  %v2588 = vadd.f32 0.0, %v2587
  %v2589 = vpop.f32.mrf.mxu0
  %v2590 = vpop.f32.mrf.mxu0
  %v2591 = vadd.f32 0.0, %v2590
  %v2592 = vpop.f32.mrf.mxu0
  %2593 = vmatprep.mubr.bf16.mxu0 0
  %2594 = vmatmul.mubr.bf16.gmra.mxu0 %v2398
  %v2595 = vpop.f32.mrf.mxu0
  %v2596 = vadd.f32 0.0, %v2595
  %v2597 = vpop.f32.mrf.mxu0
  %v2598 = vpop.f32.mrf.mxu0
  %v2599 = vadd.f32 0.0, %v2598
  %v2600 = vpop.f32.mrf.mxu0
  %2601 = vmatprep.mubr.bf16.mxu0 0
  %2602 = vmatmul.mubr.bf16.gmra.mxu0 %v2401
  %v2603 = vpop.f32.mrf.mxu0
  %v2604 = vadd.f32 0.0, %v2603
  %v2605 = vpop.f32.mrf.mxu0
  %v2606 = vpop.f32.mrf.mxu0
  %v2607 = vadd.f32 0.0, %v2606
  %v2608 = vpop.f32.mrf.mxu0
  %2609 = vmatprep.mubr.bf16.mxu0 0
  %2610 = vmatmul.mubr.bf16.gmra.mxu0 %v2404
  %v2611 = vpop.f32.mrf.mxu0
  %v2612 = vadd.f32 0.0, %v2611
  %v2613 = vpop.f32.mrf.mxu0
  %v2614 = vpop.f32.mrf.mxu0
  %v2615 = vadd.f32 0.0, %v2614
  %v2616 = vpop.f32.mrf.mxu0
  %2617 = vmatprep.mubr.bf16.mxu0 0
  %2618 = vmatmul.mubr.bf16.gmra.mxu0 %v2407
  %v2619 = vpop.f32.mrf.mxu0
  %v2620 = vadd.f32 0.0, %v2619
  %v2621 = vpop.f32.mrf.mxu0
  %v2622 = vpop.f32.mrf.mxu0
  %v2623 = vadd.f32 0.0, %v2622
  %v2624 = vpop.f32.mrf.mxu0
  %2625 = vmatprep.mubr.bf16.mxu0 0
  %2626 = vmatmul.mubr.bf16.gmra.mxu0 %v2410
  %v2627 = vpop.f32.mrf.mxu0
  %v2628 = vadd.f32 0.0, %v2627
  %v2629 = vpop.f32.mrf.mxu0
  %v2630 = vpop.f32.mrf.mxu0
  %v2631 = vadd.f32 0.0, %v2630
  %v2632 = vpop.f32.mrf.mxu0
  %2633 = vmatprep.mubr.bf16.mxu0 0
  %2634 = vmatmul.mubr.bf16.gmra.mxu0 %v2413
  %v2635 = vpop.f32.mrf.mxu0
  %v2636 = vadd.f32 0.0, %v2635
  %v2637 = vpop.f32.mrf.mxu0
  %v2638 = vpop.f32.mrf.mxu0
  %v2639 = vadd.f32 0.0, %v2638
  %v2640 = vpop.f32.mrf.mxu0
  %2641 = vmatprep.mubr.bf16.mxu0 0
  %2642 = vmatmul.mubr.bf16.gmra.mxu0 %v2416
  %v2643 = vpop.f32.mrf.mxu0
  %v2644 = vadd.f32 0.0, %v2643
  %v2645 = vpop.f32.mrf.mxu0
  %v2646 = vpop.f32.mrf.mxu0
  %v2647 = vadd.f32 0.0, %v2646
  %v2648 = vpop.f32.mrf.mxu0
  %2649 = vmatprep.mubr.bf16.mxu0 0
  %2650 = vmatmul.mubr.bf16.gmra.mxu0 %v2419
  %v2651 = vpop.f32.mrf.mxu0
  %v2652 = vadd.f32 0.0, %v2651
  %v2653 = vpop.f32.mrf.mxu0
  %v2654 = vpop.f32.mrf.mxu0
  %v2655 = vadd.f32 0.0, %v2654
  %v2656 = vpop.f32.mrf.mxu0
  %2657 = vmatprep.mubr.bf16.mxu0 0
  %2658 = vmatmul.mubr.bf16.gmra.mxu0 %v2422
  %v2659 = vpop.f32.mrf.mxu0
  %v2660 = vadd.f32 0.0, %v2659
  %v2661 = vpop.f32.mrf.mxu0
  %v2662 = vpop.f32.mrf.mxu0
  %v2663 = vadd.f32 0.0, %v2662
  %v2664 = vpop.f32.mrf.mxu0
  %2665 = vmatprep.mubr.bf16.mxu0 0
  %2666 = vmatmul.mubr.bf16.gmra.mxu0 %v2425
  %v2667 = vpop.f32.mrf.mxu0
  %v2668 = vadd.f32 0.0, %v2667
  %v2669 = vpop.f32.mrf.mxu0
  %v2670 = vpop.f32.mrf.mxu0
  %v2671 = vadd.f32 0.0, %v2670
  %v2672 = vpop.f32.mrf.mxu0
  %2673 = vmatprep.mubr.bf16.mxu0 0
  %2674 = vmatmul.mubr.bf16.gmra.mxu0 %v2428
  %v2675 = vpop.f32.mrf.mxu0
  %v2676 = vadd.f32 0.0, %v2675
  %v2677 = vpop.f32.mrf.mxu0
  %v2678 = vpop.f32.mrf.mxu0
  %v2679 = vadd.f32 0.0, %v2678
  %v2680 = vpop.f32.mrf.mxu0
  %2681 = vmatprep.mubr.bf16.mxu0 0
  %2682 = vmatmul.mubr.bf16.gmra.mxu0 %v2431
  %v2683 = vpop.f32.mrf.mxu0
  %v2684 = vadd.f32 0.0, %v2683
  %v2685 = vpop.f32.mrf.mxu0
  %v2686 = vpop.f32.mrf.mxu0
  %v2687 = vadd.f32 0.0, %v2686
  %v2688 = vpop.f32.mrf.mxu0
  %2689 = vmatprep.mubr.bf16.mxu0 0
  %2690 = vmatmul.mubr.bf16.gmra.mxu0 %v2434
  %v2691 = vpop.f32.mrf.mxu0
  %v2692 = vadd.f32 0.0, %v2691
  %v2693 = vpop.f32.mrf.mxu0
  %v2694 = vpop.f32.mrf.mxu0
  %v2695 = vadd.f32 0.0, %v2694
  %v2696 = vpop.f32.mrf.mxu0
  %2697 = vmatprep.mubr.bf16.mxu0 0
  %2698 = vmatmul.mubr.bf16.gmra.mxu0 %v2437
  %v2699 = vpop.f32.mrf.mxu0
  %v2700 = vadd.f32 0.0, %v2699
  %v2701 = vpop.f32.mrf.mxu0
  %v2702 = vpop.f32.mrf.mxu0
  %v2703 = vadd.f32 0.0, %v2702
  %v2704 = vpop.f32.mrf.mxu0
  %2705 = vmatprep.mubr.bf16.mxu0 0
  %2706 = vmatmul.mubr.bf16.gmra.mxu0 %v2440
  %v2707 = vpop.f32.mrf.mxu0
  %v2708 = vadd.f32 0.0, %v2707
  %v2709 = vpop.f32.mrf.mxu0
  %v2710 = vpop.f32.mrf.mxu0
  %v2711 = vadd.f32 0.0, %v2710
  %v2712 = vpop.f32.mrf.mxu0
  %2713 = vmatprep.mubr.bf16.mxu0 0
  %2714 = vmatmul.mubr.bf16.gmra.mxu0 %v2443
  %v2715 = vpop.f32.mrf.mxu0
  %v2716 = vadd.f32 0.0, %v2715
  %v2717 = vpop.f32.mrf.mxu0
  %v2718 = vpop.f32.mrf.mxu0
  %v2719 = vadd.f32 0.0, %v2718
  %v2720 = vpop.f32.mrf.mxu0
  %2721 = vmatprep.mubr.bf16.mxu0 0
  %2722 = vmatmul.mubr.bf16.gmra.mxu0 %v2446
  %v2723 = vpop.f32.mrf.mxu0
  %v2724 = vadd.f32 0.0, %v2723
  %v2725 = vpop.f32.mrf.mxu0
  %v2726 = vpop.f32.mrf.mxu0
  %v2727 = vadd.f32 0.0, %v2726
  %v2728 = vpop.f32.mrf.mxu0
  %2729 = vmatprep.mubr.bf16.mxu0 0
  %2730 = vmatmul.mubr.bf16.gmra.mxu0 %v2449
  %v2731 = vpop.f32.mrf.mxu0
  %v2732 = vadd.f32 0.0, %v2731
  %v2733 = vpop.f32.mrf.mxu0
  %v2734 = vpop.f32.mrf.mxu0
  %v2735 = vadd.f32 0.0, %v2734
  %v2736 = vpop.f32.mrf.mxu0
  %2737 = vmatprep.mubr.bf16.mxu0 0
  %2738 = vmatmul.mubr.bf16.gmra.mxu0 %v2452
  %v2739 = vpop.f32.mrf.mxu0
  %v2740 = vadd.f32 0.0, %v2739
  %v2741 = vpop.f32.mrf.mxu0
  %v2742 = vpop.f32.mrf.mxu0
  %v2743 = vadd.f32 0.0, %v2742
  %v2744 = vpop.f32.mrf.mxu0
  %2745 = vdwg.mxu0
  %v2746 = vadd.f32 %v1677, %v2492
  %v2747 = vadd.f32 %v1680, %v2495
  %v2748 = vadd.f32 %v1685, %v2500
  %v2749 = vadd.f32 %v1688, %v2503
  %v2750 = vadd.f32 %v1693, %v2508
  %v2751 = vadd.f32 %v1696, %v2511
  %v2752 = vadd.f32 %v1701, %v2516
  %v2753 = vadd.f32 %v1704, %v2519
  %v2754 = vadd.f32 %v1709, %v2524
  %v2755 = vadd.f32 %v1712, %v2527
  %v2756 = vadd.f32 %v1717, %v2532
  %v2757 = vadd.f32 %v1720, %v2535
  %v2758 = vadd.f32 %v1725, %v2540
  %v2759 = vadd.f32 %v1728, %v2543
  %v2760 = vadd.f32 %v1733, %v2548
  %v2761 = vadd.f32 %v1736, %v2551
  %v2762 = vadd.f32 %v1741, %v2556
  %v2763 = vadd.f32 %v1744, %v2559
  %v2764 = vadd.f32 %v1749, %v2564
  %v2765 = vadd.f32 %v1752, %v2567
  %v2766 = vadd.f32 %v1757, %v2572
  %v2767 = vadd.f32 %v1760, %v2575
  %v2768 = vadd.f32 %v1765, %v2580
  %v2769 = vadd.f32 %v1768, %v2583
  %v2770 = vadd.f32 %v1773, %v2588
  %v2771 = vadd.f32 %v1776, %v2591
  %v2772 = vadd.f32 %v1781, %v2596
  %v2773 = vadd.f32 %v1784, %v2599
  %v2774 = vadd.f32 %v1789, %v2604
  %v2775 = vadd.f32 %v1792, %v2607
  %v2776 = vadd.f32 %v1797, %v2612
  %v2777 = vadd.f32 %v1800, %v2615
  %v2778 = vadd.f32 %v1805, %v2620
  %v2779 = vadd.f32 %v1808, %v2623
  %v2780 = vadd.f32 %v1813, %v2628
  %v2781 = vadd.f32 %v1816, %v2631
  %v2782 = vadd.f32 %v1821, %v2636
  %v2783 = vadd.f32 %v1824, %v2639
  %v2784 = vadd.f32 %v1829, %v2644
  %v2785 = vadd.f32 %v1832, %v2647
  %v2786 = vadd.f32 %v1837, %v2652
  %v2787 = vadd.f32 %v1840, %v2655
  %v2788 = vadd.f32 %v1845, %v2660
  %v2789 = vadd.f32 %v1848, %v2663
  %v2790 = vadd.f32 %v1853, %v2668
  %v2791 = vadd.f32 %v1856, %v2671
  %v2792 = vadd.f32 %v1861, %v2676
  %v2793 = vadd.f32 %v1864, %v2679
  %v2794 = vadd.f32 %v1869, %v2684
  %v2795 = vadd.f32 %v1872, %v2687
  %v2796 = vadd.f32 %v1877, %v2692
  %v2797 = vadd.f32 %v1880, %v2695
  %v2798 = vadd.f32 %v1885, %v2700
  %v2799 = vadd.f32 %v1888, %v2703
  %v2800 = vadd.f32 %v1893, %v2708
  %v2801 = vadd.f32 %v1896, %v2711
  %v2802 = vadd.f32 %v1901, %v2716
  %v2803 = vadd.f32 %v1904, %v2719
  %v2804 = vadd.f32 %v1909, %v2724
  %v2805 = vadd.f32 %v1912, %v2727
  %v2806 = vadd.f32 %v1917, %v2732
  %v2807 = vadd.f32 %v1920, %v2735
  %v2808 = vadd.f32 %v1925, %v2740
  %v2809 = vadd.f32 %v1928, %v2743
  %v2810 = vld [vmem:[%s2] sm:$0x1]
  %v2812 = vlaneseq
  %v2813 = vshrl.u32 %v2812, 7
  %v2814 = vsub.s32 0, %v2813
  %v2815 = vrot.slane %v2810, %v2814
  %v2817 = vadd.f32 %v2746, %v2815
  %v2818 = vadd.f32 %v2747, %v2815
  %v2819 = vadd.f32 %v2748, %v2815
  %v2820 = vadd.f32 %v2749, %v2815
  %v2821 = vadd.f32 %v2750, %v2815
  %v2822 = vadd.f32 %v2751, %v2815
  %v2823 = vadd.f32 %v2752, %v2815
  %v2824 = vadd.f32 %v2753, %v2815
  %v2825 = vadd.f32 %v2754, %v2815
  %v2826 = vadd.f32 %v2755, %v2815
  %v2827 = vadd.f32 %v2756, %v2815
  %v2828 = vadd.f32 %v2757, %v2815
  %v2829 = vadd.f32 %v2758, %v2815
  %v2830 = vadd.f32 %v2759, %v2815
  %v2831 = vadd.f32 %v2760, %v2815
  %v2832 = vadd.f32 %v2761, %v2815
  %v2833 = vadd.f32 %v2762, %v2815
  %v2834 = vadd.f32 %v2763, %v2815
  %v2835 = vadd.f32 %v2764, %v2815
  %v2836 = vadd.f32 %v2765, %v2815
  %v2837 = vadd.f32 %v2766, %v2815
  %v2838 = vadd.f32 %v2767, %v2815
  %v2839 = vadd.f32 %v2768, %v2815
  %v2840 = vadd.f32 %v2769, %v2815
  %v2841 = vadd.f32 %v2770, %v2815
  %v2842 = vadd.f32 %v2771, %v2815
  %v2843 = vadd.f32 %v2772, %v2815
  %v2844 = vadd.f32 %v2773, %v2815
  %v2845 = vadd.f32 %v2774, %v2815
  %v2846 = vadd.f32 %v2775, %v2815
  %v2847 = vadd.f32 %v2776, %v2815
  %v2848 = vadd.f32 %v2777, %v2815
  %v2849 = vadd.f32 %v2778, %v2815
  %v2850 = vadd.f32 %v2779, %v2815
  %v2851 = vadd.f32 %v2780, %v2815
  %v2852 = vadd.f32 %v2781, %v2815
  %v2853 = vadd.f32 %v2782, %v2815
  %v2854 = vadd.f32 %v2783, %v2815
  %v2855 = vadd.f32 %v2784, %v2815
  %v2856 = vadd.f32 %v2785, %v2815
  %v2857 = vadd.f32 %v2786, %v2815
  %v2858 = vadd.f32 %v2787, %v2815
  %v2859 = vadd.f32 %v2788, %v2815
  %v2860 = vadd.f32 %v2789, %v2815
  %v2861 = vadd.f32 %v2790, %v2815
  %v2862 = vadd.f32 %v2791, %v2815
  %v2863 = vadd.f32 %v2792, %v2815
  %v2864 = vadd.f32 %v2793, %v2815
  %v2865 = vadd.f32 %v2794, %v2815
  %v2866 = vadd.f32 %v2795, %v2815
  %v2867 = vadd.f32 %v2796, %v2815
  %v2868 = vadd.f32 %v2797, %v2815
  %v2869 = vadd.f32 %v2798, %v2815
  %v2870 = vadd.f32 %v2799, %v2815
  %v2871 = vadd.f32 %v2800, %v2815
  %v2872 = vadd.f32 %v2801, %v2815
  %v2873 = vadd.f32 %v2802, %v2815
  %v2874 = vadd.f32 %v2803, %v2815
  %v2875 = vadd.f32 %v2804, %v2815
  %v2876 = vadd.f32 %v2805, %v2815
  %v2877 = vadd.f32 %v2806, %v2815
  %v2878 = vadd.f32 %v2807, %v2815
  %v2879 = vadd.f32 %v2808, %v2815
  %v2880 = vadd.f32 %v2809, %v2815
  %v2881 = vmax.f32 %v2817, 0.0
  %v2882 = vmax.f32 %v2818, 0.0
  %v2883 = vmax.f32 %v2819, 0.0
  %v2884 = vmax.f32 %v2820, 0.0
  %v2885 = vmax.f32 %v2821, 0.0
  %v2886 = vmax.f32 %v2822, 0.0
  %v2887 = vmax.f32 %v2823, 0.0
  %v2888 = vmax.f32 %v2824, 0.0
  %v2889 = vmax.f32 %v2825, 0.0
  %v2890 = vmax.f32 %v2826, 0.0
  %v2891 = vmax.f32 %v2827, 0.0
  %v2892 = vmax.f32 %v2828, 0.0
  %v2893 = vmax.f32 %v2829, 0.0
  %v2894 = vmax.f32 %v2830, 0.0
  %v2895 = vmax.f32 %v2831, 0.0
  %v2896 = vmax.f32 %v2832, 0.0
  %v2897 = vmax.f32 %v2833, 0.0
  %v2898 = vmax.f32 %v2834, 0.0
  %v2899 = vmax.f32 %v2835, 0.0
  %v2900 = vmax.f32 %v2836, 0.0
  %v2901 = vmax.f32 %v2837, 0.0
  %v2902 = vmax.f32 %v2838, 0.0
  %v2903 = vmax.f32 %v2839, 0.0
  %v2904 = vmax.f32 %v2840, 0.0
  %v2905 = vmax.f32 %v2841, 0.0
  %v2906 = vmax.f32 %v2842, 0.0
  %v2907 = vmax.f32 %v2843, 0.0
  %v2908 = vmax.f32 %v2844, 0.0
  %v2909 = vmax.f32 %v2845, 0.0
  %v2910 = vmax.f32 %v2846, 0.0
  %v2911 = vmax.f32 %v2847, 0.0
  %v2912 = vmax.f32 %v2848, 0.0
  %v2913 = vmax.f32 %v2849, 0.0
  %v2914 = vmax.f32 %v2850, 0.0
  %v2915 = vmax.f32 %v2851, 0.0
  %v2916 = vmax.f32 %v2852, 0.0
  %v2917 = vmax.f32 %v2853, 0.0
  %v2918 = vmax.f32 %v2854, 0.0
  %v2919 = vmax.f32 %v2855, 0.0
  %v2920 = vmax.f32 %v2856, 0.0
  %v2921 = vmax.f32 %v2857, 0.0
  %v2922 = vmax.f32 %v2858, 0.0
  %v2923 = vmax.f32 %v2859, 0.0
  %v2924 = vmax.f32 %v2860, 0.0
  %v2925 = vmax.f32 %v2861, 0.0
  %v2926 = vmax.f32 %v2862, 0.0
  %v2927 = vmax.f32 %v2863, 0.0
  %v2928 = vmax.f32 %v2864, 0.0
  %v2929 = vmax.f32 %v2865, 0.0
  %v2930 = vmax.f32 %v2866, 0.0
  %v2931 = vmax.f32 %v2867, 0.0
  %v2932 = vmax.f32 %v2868, 0.0
  %v2933 = vmax.f32 %v2869, 0.0
  %v2934 = vmax.f32 %v2870, 0.0
  %v2935 = vmax.f32 %v2871, 0.0
  %v2936 = vmax.f32 %v2872, 0.0
  %v2937 = vmax.f32 %v2873, 0.0
  %v2938 = vmax.f32 %v2874, 0.0
  %v2939 = vmax.f32 %v2875, 0.0
  %v2940 = vmax.f32 %v2876, 0.0
  %v2941 = vmax.f32 %v2877, 0.0
  %v2942 = vmax.f32 %v2878, 0.0
  %v2943 = vmax.f32 %v2879, 0.0
  %v2944 = vmax.f32 %v2880, 0.0
  %2945 = vst [vmem:[%s3] sm:$0xff] %v2881
  %2946 = vst [vmem:[%s3 + $0x8] sm:$0xff] %v2882
  %2947 = vst [vmem:[%s3 + $0x10] sm:$0xff] %v2883
  %2948 = vst [vmem:[%s3 + $0x18] sm:$0xff] %v2884
  %2949 = vst [vmem:[%s3 + $0x20] sm:$0xff] %v2885
  %2950 = vst [vmem:[%s3 + $0x28] sm:$0xff] %v2886
  %2951 = vst [vmem:[%s3 + $0x30] sm:$0xff] %v2887
  %2952 = vst [vmem:[%s3 + $0x38] sm:$0xff] %v2888
  %2953 = vst [vmem:[%s3 + $0x40] sm:$0xff] %v2889
  %2954 = vst [vmem:[%s3 + $0x48] sm:$0xff] %v2890
  %2955 = vst [vmem:[%s3 + $0x50] sm:$0xff] %v2891
  %2956 = vst [vmem:[%s3 + $0x58] sm:$0xff] %v2892
  %2957 = vst [vmem:[%s3 + $0x60] sm:$0xff] %v2893
  %2958 = vst [vmem:[%s3 + $0x68] sm:$0xff] %v2894
  %2959 = vst [vmem:[%s3 + $0x70] sm:$0xff] %v2895
  %2960 = vst [vmem:[%s3 + $0x78] sm:$0xff] %v2896
  %2961 = vst [vmem:[%s3 + $0x80] sm:$0xff] %v2897
  %2962 = vst [vmem:[%s3 + $0x88] sm:$0xff] %v2898
  %2963 = vst [vmem:[%s3 + $0x90] sm:$0xff] %v2899
  %2964 = vst [vmem:[%s3 + $0x98] sm:$0xff] %v2900
  %2965 = vst [vmem:[%s3 + $0xa0] sm:$0xff] %v2901
  %2966 = vst [vmem:[%s3 + $0xa8] sm:$0xff] %v2902
  %2967 = vst [vmem:[%s3 + $0xb0] sm:$0xff] %v2903
  %2968 = vst [vmem:[%s3 + $0xb8] sm:$0xff] %v2904
  %2969 = vst [vmem:[%s3 + $0xc0] sm:$0xff] %v2905
  %2970 = vst [vmem:[%s3 + $0xc8] sm:$0xff] %v2906
  %2971 = vst [vmem:[%s3 + $0xd0] sm:$0xff] %v2907
  %2972 = vst [vmem:[%s3 + $0xd8] sm:$0xff] %v2908
  %2973 = vst [vmem:[%s3 + $0xe0] sm:$0xff] %v2909
  %2974 = vst [vmem:[%s3 + $0xe8] sm:$0xff] %v2910
  %2975 = vst [vmem:[%s3 + $0xf0] sm:$0xff] %v2911
  %2976 = vst [vmem:[%s3 + $0xf8] sm:$0xff] %v2912
  %2977 = vst [vmem:[%s3 + $0x100] sm:$0xff] %v2913
  %2978 = vst [vmem:[%s3 + $0x108] sm:$0xff] %v2914
  %2979 = vst [vmem:[%s3 + $0x110] sm:$0xff] %v2915
  %2980 = vst [vmem:[%s3 + $0x118] sm:$0xff] %v2916
  %2981 = vst [vmem:[%s3 + $0x120] sm:$0xff] %v2917
  %2982 = vst [vmem:[%s3 + $0x128] sm:$0xff] %v2918
  %2983 = vst [vmem:[%s3 + $0x130] sm:$0xff] %v2919
  %2984 = vst [vmem:[%s3 + $0x138] sm:$0xff] %v2920
  %2985 = vst [vmem:[%s3 + $0x140] sm:$0xff] %v2921
  %2986 = vst [vmem:[%s3 + $0x148] sm:$0xff] %v2922
  %2987 = vst [vmem:[%s3 + $0x150] sm:$0xff] %v2923
  %2988 = vst [vmem:[%s3 + $0x158] sm:$0xff] %v2924
  %2989 = vst [vmem:[%s3 + $0x160] sm:$0xff] %v2925
  %2990 = vst [vmem:[%s3 + $0x168] sm:$0xff] %v2926
  %2991 = vst [vmem:[%s3 + $0x170] sm:$0xff] %v2927
  %2992 = vst [vmem:[%s3 + $0x178] sm:$0xff] %v2928
  %2993 = vst [vmem:[%s3 + $0x180] sm:$0xff] %v2929
  %2994 = vst [vmem:[%s3 + $0x188] sm:$0xff] %v2930
  %2995 = vst [vmem:[%s3 + $0x190] sm:$0xff] %v2931
  %2996 = vst [vmem:[%s3 + $0x198] sm:$0xff] %v2932
  %2997 = vst [vmem:[%s3 + $0x1a0] sm:$0xff] %v2933
  %2998 = vst [vmem:[%s3 + $0x1a8] sm:$0xff] %v2934
  %2999 = vst [vmem:[%s3 + $0x1b0] sm:$0xff] %v2935
  %3000 = vst [vmem:[%s3 + $0x1b8] sm:$0xff] %v2936
  %3001 = vst [vmem:[%s3 + $0x1c0] sm:$0xff] %v2937
  %3002 = vst [vmem:[%s3 + $0x1c8] sm:$0xff] %v2938
  %3003 = vst [vmem:[%s3 + $0x1d0] sm:$0xff] %v2939
  %3004 = vst [vmem:[%s3 + $0x1d8] sm:$0xff] %v2940
  %3005 = vst [vmem:[%s3 + $0x1e0] sm:$0xff] %v2941
  %3006 = vst [vmem:[%s3 + $0x1e8] sm:$0xff] %v2942
  %3007 = vst [vmem:[%s3 + $0x1f0] sm:$0xff] %v2943
  %3008 = vst [vmem:[%s3 + $0x1f8] sm:$0xff] %v2944
  // Predicated region
  $region14: #{conv2d_block_forward.1} parent=0 // pred_check
    _
  $region15: #{conv2d_block_forward.1} parent=0 // pred_check_branch
    %3010 = sbr.rel (0) target = $region17
  $region16: #{conv2d_block_forward.1} parent=0 // pred_region
    _
  $region17: #{conv2d_block_forward.1} parent=0 // pred_fallthru
    _
  // Predicated region
  $region18: #{conv2d_block_forward.1} parent=0 // pred_check
    _
  $region19: #{conv2d_block_forward.1} parent=0 // pred_check_branch
    %3012 = sbr.rel (0) target = $region21
  $region20: #{conv2d_block_forward.1} parent=0 // pred_region
    _
  $region21: #{conv2d_block_forward.1} parent=0 // pred_fallthru
    _

</llo_original>
